<compile_context>
chip_gen: v7x
topology: tpu7x:2x2x1
jax: 0.10.0
libtpu: 0.0.40
codegen_flags: <defaults>
</compile_context>

<pallas_src>
import functools
import math

import jax
import jax.numpy as jnp
from jax.experimental import pallas as pl
from jax.experimental.pallas import tpu as pltpu


def _mlp_kernel(*refs, n_hidden_layers, lane_dense_out):
    """refs = (x_ref, w0, b0, w1, b1, ..., w_out, b_out, o_ref).

    x_ref : (batch_tile, nfeatures)            compute dtype (bf16)
    w_i   : (in, out) compute dtype            b_i : (1, out) f32
    w_out : (in, ntargets), or (1, in) pre-transposed when lane_dense_out
    o_ref : (batch_tile, ntargets), or (1, batch_tile) when lane_dense_out
    """
    x_ref = refs[0]
    o_ref = refs[-1]
    param_refs = refs[1:-1]

    h = x_ref[...]  # bf16 tile

    # Hidden layers: Linear (MXU, f32 accumulate) + bias + ReLU in f32,
    # then back to bf16 for the next MXU pass.  Python-unrolled (no traced
    # loop -> no re-materialized broadcasts).
    for layer in range(n_hidden_layers):
        w_ref = param_refs[2 * layer]
        b_ref = param_refs[2 * layer + 1]
        acc = jnp.dot(h, w_ref[...], preferred_element_type=jnp.float32)
        acc = jnp.maximum(acc + b_ref[...], 0.0)
        h = acc.astype(w_ref.dtype)

    w_out_ref = param_refs[2 * n_hidden_layers]
    b_out_ref = param_refs[2 * n_hidden_layers + 1]

    if lane_dense_out:
        # w_out_ref is (1, H) (pre-transposed in the wrapper).  Contract the H
        # dims of (1, H) and (batch_tile, H) so the result is (1, batch_tile):
        # already lane-dense, so the store/writeback uses full 128-lane vregs.
        y = jax.lax.dot_general(
            w_out_ref[...], h,
            dimension_numbers=(((1,), (1,)), ((), ())),
            preferred_element_type=jnp.float32)
        y = y + b_out_ref[...]                      # (1, 1) broadcasts over lanes
    else:
        y = jnp.dot(h, w_out_ref[...], preferred_element_type=jnp.float32)
        y = y + b_out_ref[...]
    o_ref[...] = jax.nn.sigmoid(y).astype(o_ref.dtype)


def regression_model_forward(x, params, *, batch_tile=512,
                             compute_dtype=jnp.bfloat16,
                             vmem_limit_bytes=None):
    """Fused MLP forward pass.

    x:      [B, nfeatures] float32
    params: flat list [w0, b0, w1, b1, ..., w_out, b_out]
            wi: [in, out], bi: [1, out]
    """
    B, nfeatures = x.shape
    ntargets = params[-1].shape[-1]
    n_hidden_layers = (len(params) - 2) // 2
    out_dtype = x.dtype

    lane_dense_out = (ntargets == 1)
    sublane = 16 if jnp.dtype(compute_dtype) == jnp.bfloat16 else 8
    # Lane-dense output block has batch_tile as its last (lane) dim -> %128.
    min_tile = 128 if lane_dense_out else sublane
    assert batch_tile % min_tile == 0, (batch_tile, min_tile)

    comp_bytes = jnp.dtype(compute_dtype).itemsize
    out_bytes = jnp.dtype(out_dtype).itemsize
    param_bytes = sum(
        math.prod(p.shape) * (comp_bytes if i % 2 == 0 else 4)
        for i, p in enumerate(params))

    def vmem_footprint(bt):
        # BlockSpec double-buffers every operand (resident weights included).
        return 2 * (bt * nfeatures * comp_bytes
                    + bt * ntargets * out_bytes
                    + param_bytes)

    VMEM_BUDGET = 48 * (1 << 20)   # stays safe on v7x (64 MiB physical per TC)
    while batch_tile > min_tile and vmem_footprint(batch_tile) > VMEM_BUDGET:
        batch_tile //= 2
    if vmem_limit_bytes is None:
        vmem_limit_bytes = int(
            min(max(4 * vmem_footprint(batch_tile), 32 * (1 << 20)), VMEM_BUDGET))

    # Pad the batch so it divides evenly into tiles (padding sliced off below).
    B_pad = ((B + batch_tile - 1) // batch_tile) * batch_tile
    if B_pad != B:
        x = jnp.pad(x, ((0, B_pad - B), (0, 0)))

    # bf16 activations + weights (kernel is HBM-bandwidth bound); biases and
    # all accumulation stay f32.
    x_c = x.astype(compute_dtype)
    params_c = []
    for i, p in enumerate(params):
        params_c.append(p.astype(compute_dtype) if i % 2 == 0
                        else p.astype(jnp.float32))
    if lane_dense_out:
        params_c[-2] = params_c[-2].T          # (H, 1) -> (1, H)

    grid = (B_pad // batch_tile,)

    in_specs = [pl.BlockSpec((batch_tile, nfeatures), lambda i: (i, 0))]
    for p in params_c:                          # small params: loaded whole
        in_specs.append(pl.BlockSpec(p.shape, lambda i: (0, 0)))

    if lane_dense_out:
        out_shape = jax.ShapeDtypeStruct((1, B_pad), out_dtype)
        out_spec = pl.BlockSpec((1, batch_tile), lambda i: (0, i))
    else:
        out_shape = jax.ShapeDtypeStruct((B_pad, ntargets), out_dtype)
        out_spec = pl.BlockSpec((batch_tile, ntargets), lambda i: (i, 0))

    kernel = functools.partial(_mlp_kernel,
                               n_hidden_layers=n_hidden_layers,
                               lane_dense_out=lane_dense_out)

    out = pl.pallas_call(
        kernel,
        out_shape=out_shape,
        grid_spec=pltpu.PrefetchScalarGridSpec(
            num_scalar_prefetch=0,
            grid=grid,
            in_specs=in_specs,
            out_specs=out_spec,
        ),
        compiler_params=pltpu.CompilerParams(
            dimension_semantics=("parallel",),
            vmem_limit_bytes=vmem_limit_bytes,
        ),
    )(x_c, *params_c)

    if lane_dense_out:
        out = out.reshape(B_pad, 1)
    return out[:B]


def init_params(key, nfeatures, ntargets, nlayers, hidden_size):
    """Deterministic synthetic parameters matching the module's shapes."""
    params = []
    in_dim = nfeatures
    for _ in range(nlayers):
        key, kw, kb = jax.random.split(key, 3)
        bound = 1.0 / jnp.sqrt(in_dim)
        w = jax.random.uniform(kw, (in_dim, hidden_size), jnp.float32, -bound, bound)
        b = jax.random.uniform(kb, (1, hidden_size), jnp.float32, -bound, bound)
        params.extend([w, b])
        in_dim = hidden_size
    key, kw, kb = jax.random.split(key, 3)
    bound = 1.0 / jnp.sqrt(in_dim)
    w_out = jax.random.uniform(kw, (in_dim, ntargets), jnp.float32, -bound, bound)
    b_out = jax.random.uniform(kb, (1, ntargets), jnp.float32, -bound, bound)
    params.extend([w_out, b_out])
    return params


def _reference_forward(x, params, compute_dtype=jnp.bfloat16):
    """Pure-JAX reference with the same precision policy as the kernel."""
    n_hidden = (len(params) - 2) // 2
    h = x.astype(compute_dtype)
    for i in range(n_hidden):
        w = params[2 * i].astype(compute_dtype)
        b = params[2 * i + 1].astype(jnp.float32)
        h = jnp.maximum(
            jnp.dot(h, w, preferred_element_type=jnp.float32) + b, 0.0
        ).astype(compute_dtype)
    w = params[-2].astype(compute_dtype)
    b = params[-1].astype(jnp.float32)
    y = jnp.dot(h, w, preferred_element_type=jnp.float32) + b
    return jax.nn.sigmoid(y).astype(x.dtype)


if __name__ == "__main__":
    # Shapes consistent with the module's forward (dropout is unused there).
    nfeatures, ntargets, nlayers, hidden_size, dropout = 8, 1, 3, 32, 0.1
    batch = 2000   # not a tile multiple: exercises padding; grid = 4 tiles of 512

    key = jax.random.PRNGKey(0)
    key, kx = jax.random.split(key)
    x = jax.random.normal(kx, (batch, nfeatures), dtype=jnp.float32)
    params = init_params(key, nfeatures, ntargets, nlayers, hidden_size)

    out = jax.block_until_ready(regression_model_forward(x, params))
    ref = _reference_forward(x, params)
    assert out.shape == (batch, ntargets)
    assert jnp.allclose(out, ref, atol=5e-3, rtol=5e-3), \
        float(jnp.max(jnp.abs(out - ref)))

    # Also exercise the generic (ntargets > 1) 2-D output path.
    nt2 = 3
    key, kx2 = jax.random.split(key)
    x2 = jax.random.normal(kx2, (256, nfeatures), dtype=jnp.float32)
    params2 = init_params(key, nfeatures, nt2, 2, hidden_size)
    out2 = jax.block_until_ready(
        regression_model_forward(x2, params2, batch_tile=128))
    ref2 = _reference_forward(x2, params2)
    assert out2.shape == (256, nt2)
    assert jnp.allclose(out2, ref2, atol=5e-3, rtol=5e-3)

    print("KERNEL_OK")
</pallas_src>

<mosaic_0001>
module attributes {stable_mosaic.version = 11 : i64} {
  func.func @_mlp_kernel(%arg0: i32, %arg1: memref<512x8xbf16, #tpu.memory_space<vmem>>, %arg2: memref<8x32xbf16, #tpu.memory_space<vmem>>, %arg3: memref<1x32xf32, #tpu.memory_space<vmem>>, %arg4: memref<32x32xbf16, #tpu.memory_space<vmem>>, %arg5: memref<1x32xf32, #tpu.memory_space<vmem>>, %arg6: memref<32x32xbf16, #tpu.memory_space<vmem>>, %arg7: memref<1x32xf32, #tpu.memory_space<vmem>>, %arg8: memref<1x32xbf16, #tpu.memory_space<vmem>>, %arg9: memref<1x1xf32, #tpu.memory_space<vmem>>, %arg10: memref<1x512xf32, #tpu.memory_space<vmem>>) attributes {dimension_semantics = [#tpu.dimension_semantics<parallel>], iteration_bounds = array<i64: 4>, scalar_prefetch = 0 : i64, scratch_operands = 0 : i64, tpu.core_type = #tpu.core_type<tc>, window_params = [{transform_indices = @transform_0, window_bounds = array<i64: 512, 8>}, {pipeline_mode = #tpu.pipeline_mode<synchronous>, transform_indices = @transform_1, window_bounds = array<i64: 8, 32>}, {pipeline_mode = #tpu.pipeline_mode<synchronous>, transform_indices = @transform_2, window_bounds = array<i64: 1, 32>}, {pipeline_mode = #tpu.pipeline_mode<synchronous>, transform_indices = @transform_3, window_bounds = array<i64: 32, 32>}, {pipeline_mode = #tpu.pipeline_mode<synchronous>, transform_indices = @transform_4, window_bounds = array<i64: 1, 32>}, {pipeline_mode = #tpu.pipeline_mode<synchronous>, transform_indices = @transform_5, window_bounds = array<i64: 32, 32>}, {pipeline_mode = #tpu.pipeline_mode<synchronous>, transform_indices = @transform_6, window_bounds = array<i64: 1, 32>}, {pipeline_mode = #tpu.pipeline_mode<synchronous>, transform_indices = @transform_7, window_bounds = array<i64: 1, 32>}, {pipeline_mode = #tpu.pipeline_mode<synchronous>, transform_indices = @transform_8, window_bounds = array<i64: 1, 1>}, {transform_indices = @transform_9, window_bounds = array<i64: 1, 512>}]} {
    %c0 = arith.constant 0 : index
    %c0_0 = arith.constant 0 : index
    %0 = vector.load %arg1[%c0, %c0_0] : memref<512x8xbf16, #tpu.memory_space<vmem>>, vector<512x8xbf16>
    %c0_1 = arith.constant 0 : index
    %c0_2 = arith.constant 0 : index
    %1 = vector.load %arg2[%c0_1, %c0_2] : memref<8x32xbf16, #tpu.memory_space<vmem>>, vector<8x32xbf16>
    %cst = arith.constant dense<0.000000e+00> : vector<512x32xf32>
    %2 = tpu.matmul %0, %1, %cst {dimension_numbers = #tpu.dot_dimension_numbers<[1], [0], [0], [1], [0, 0, 1, 1], [], []>} : vector<512x8xbf16>, vector<8x32xbf16>, vector<512x32xf32> -> vector<512x32xf32>
    %c0_3 = arith.constant 0 : index
    %c0_4 = arith.constant 0 : index
    %3 = vector.load %arg3[%c0_3, %c0_4] : memref<1x32xf32, #tpu.memory_space<vmem>>, vector<1x32xf32>
    %4 = vector.broadcast %3 : vector<1x32xf32> to vector<512x32xf32>
    %5 = arith.addf %2, %4 : vector<512x32xf32>
    %cst_5 = arith.constant 0.000000e+00 : f32
    %6 = vector.broadcast %cst_5 : f32 to vector<512x32xf32>
    %7 = arith.maximumf %5, %6 : vector<512x32xf32>
    %8 = arith.truncf %7 : vector<512x32xf32> to vector<512x32xbf16>
    %c0_6 = arith.constant 0 : index
    %c0_7 = arith.constant 0 : index
    %9 = vector.load %arg4[%c0_6, %c0_7] : memref<32x32xbf16, #tpu.memory_space<vmem>>, vector<32x32xbf16>
    %cst_8 = arith.constant dense<0.000000e+00> : vector<512x32xf32>
    %10 = tpu.matmul %8, %9, %cst_8 {dimension_numbers = #tpu.dot_dimension_numbers<[1], [0], [0], [1], [0, 0, 1, 1], [], []>} : vector<512x32xbf16>, vector<32x32xbf16>, vector<512x32xf32> -> vector<512x32xf32>
    %c0_9 = arith.constant 0 : index
    %c0_10 = arith.constant 0 : index
    %11 = vector.load %arg5[%c0_9, %c0_10] : memref<1x32xf32, #tpu.memory_space<vmem>>, vector<1x32xf32>
    %12 = vector.broadcast %11 : vector<1x32xf32> to vector<512x32xf32>
    %13 = arith.addf %10, %12 : vector<512x32xf32>
    %cst_11 = arith.constant 0.000000e+00 : f32
    %14 = vector.broadcast %cst_11 : f32 to vector<512x32xf32>
    %15 = arith.maximumf %13, %14 : vector<512x32xf32>
    %16 = arith.truncf %15 : vector<512x32xf32> to vector<512x32xbf16>
    %c0_12 = arith.constant 0 : index
    %c0_13 = arith.constant 0 : index
    %17 = vector.load %arg6[%c0_12, %c0_13] : memref<32x32xbf16, #tpu.memory_space<vmem>>, vector<32x32xbf16>
    %cst_14 = arith.constant dense<0.000000e+00> : vector<512x32xf32>
    %18 = tpu.matmul %16, %17, %cst_14 {dimension_numbers = #tpu.dot_dimension_numbers<[1], [0], [0], [1], [0, 0, 1, 1], [], []>} : vector<512x32xbf16>, vector<32x32xbf16>, vector<512x32xf32> -> vector<512x32xf32>
    %c0_15 = arith.constant 0 : index
    %c0_16 = arith.constant 0 : index
    %19 = vector.load %arg7[%c0_15, %c0_16] : memref<1x32xf32, #tpu.memory_space<vmem>>, vector<1x32xf32>
    %20 = vector.broadcast %19 : vector<1x32xf32> to vector<512x32xf32>
    %21 = arith.addf %18, %20 : vector<512x32xf32>
    %cst_17 = arith.constant 0.000000e+00 : f32
    %22 = vector.broadcast %cst_17 : f32 to vector<512x32xf32>
    %23 = arith.maximumf %21, %22 : vector<512x32xf32>
    %24 = arith.truncf %23 : vector<512x32xf32> to vector<512x32xbf16>
    %c0_18 = arith.constant 0 : index
    %c0_19 = arith.constant 0 : index
    %25 = vector.load %arg8[%c0_18, %c0_19] : memref<1x32xbf16, #tpu.memory_space<vmem>>, vector<1x32xbf16>
    %cst_20 = arith.constant dense<0.000000e+00> : vector<1x512xf32>
    %26 = tpu.matmul %25, %24, %cst_20 {dimension_numbers = #tpu.dot_dimension_numbers<[1], [1], [0], [0], [0, 0, 1, 0], [], []>} : vector<1x32xbf16>, vector<512x32xbf16>, vector<1x512xf32> -> vector<1x512xf32>
    %c0_21 = arith.constant 0 : index
    %c0_22 = arith.constant 0 : index
    %27 = vector.load %arg9[%c0_21, %c0_22] : memref<1x1xf32, #tpu.memory_space<vmem>>, vector<1x1xf32>
    %28 = vector.broadcast %27 : vector<1x1xf32> to vector<1x512xf32>
    %29 = arith.addf %26, %28 : vector<1x512xf32>
    %30 = arith.negf %29 : vector<1x512xf32>
    %31 = math.exp %30 : vector<1x512xf32>
    %cst_23 = arith.constant 1.000000e+00 : f32
    %32 = vector.broadcast %cst_23 : f32 to vector<1x512xf32>
    %33 = arith.addf %32, %31 : vector<1x512xf32>
    %34 = arith.divf %32, %33 : vector<1x512xf32>
    %c0_24 = arith.constant 0 : index
    %c0_25 = arith.constant 0 : index
    %35 = vector.load %arg10[%c0_24, %c0_25] : memref<1x512xf32, #tpu.memory_space<vmem>>, vector<1x512xf32>
    tpu.vector_store %arg10[%c0_24, %c0_25], %34 {strides = array<i32>} : memref<1x512xf32, #tpu.memory_space<vmem>>, vector<1x512xf32>,
    return
  }
  func.func @transform_0(%arg0: i32) -> (i32, i32) {
    %c0_i32 = arith.constant 0 : i32
    %c0_i32_0 = arith.constant 0 : i32
    return %arg0, %c0_i32 : i32, i32
  }
  func.func @transform_1(%arg0: i32) -> (i32, i32) {
    %c0_i32 = arith.constant 0 : i32
    %c0_i32_0 = arith.constant 0 : i32
    %c0_i32_1 = arith.constant 0 : i32
    return %c0_i32, %c0_i32_0 : i32, i32
  }
  func.func @transform_2(%arg0: i32) -> (i32, i32) {
    %c0_i32 = arith.constant 0 : i32
    %c0_i32_0 = arith.constant 0 : i32
    %c0_i32_1 = arith.constant 0 : i32
    return %c0_i32, %c0_i32_0 : i32, i32
  }
  func.func @transform_3(%arg0: i32) -> (i32, i32) {
    %c0_i32 = arith.constant 0 : i32
    %c0_i32_0 = arith.constant 0 : i32
    %c0_i32_1 = arith.constant 0 : i32
    return %c0_i32, %c0_i32_0 : i32, i32
  }
  func.func @transform_4(%arg0: i32) -> (i32, i32) {
    %c0_i32 = arith.constant 0 : i32
    %c0_i32_0 = arith.constant 0 : i32
    %c0_i32_1 = arith.constant 0 : i32
    return %c0_i32, %c0_i32_0 : i32, i32
  }
  func.func @transform_5(%arg0: i32) -> (i32, i32) {
    %c0_i32 = arith.constant 0 : i32
    %c0_i32_0 = arith.constant 0 : i32
    %c0_i32_1 = arith.constant 0 : i32
    return %c0_i32, %c0_i32_0 : i32, i32
  }
  func.func @transform_6(%arg0: i32) -> (i32, i32) {
    %c0_i32 = arith.constant 0 : i32
    %c0_i32_0 = arith.constant 0 : i32
    %c0_i32_1 = arith.constant 0 : i32
    return %c0_i32, %c0_i32_0 : i32, i32
  }
  func.func @transform_7(%arg0: i32) -> (i32, i32) {
    %c0_i32 = arith.constant 0 : i32
    %c0_i32_0 = arith.constant 0 : i32
    %c0_i32_1 = arith.constant 0 : i32
    return %c0_i32, %c0_i32_0 : i32, i32
  }
  func.func @transform_8(%arg0: i32) -> (i32, i32) {
    %c0_i32 = arith.constant 0 : i32
    %c0_i32_0 = arith.constant 0 : i32
    %c0_i32_1 = arith.constant 0 : i32
    return %c0_i32, %c0_i32_0 : i32, i32
  }
  func.func @transform_9(%arg0: i32) -> (i32, i32) {
    %c0_i32 = arith.constant 0 : i32
    %c0_i32_0 = arith.constant 0 : i32
    return %c0_i32, %arg0 : i32, i32
  }
}

</mosaic_0001>

<llo_original>
// kernel: tpu_custom_call.1
$region0: #{tpu_custom_call.1}
  #allocation0 [shape = 'u32[]', space=smem, size = 0x4, offset = 0x4, fixed_abs, tag = 'smem constant byte address 0x4 - core index']
  #allocation1 [shape = 'u32[144,128]{1,0:T(1,128)}', space=vmem, size = 0x12000, scoped, tag = 'internal scratch']
  #allocation2 [shape = 'f32[1,1]{1,0:T(1,128)S(1)}', space=vmem, size = 0x200, scoped, tag = 'scoped memory for tpu_custom_call.1']
  %s0 = inlined_call_operand.vmem [shape: bf16[2048,8], index: 0, kind: input, shape index: {}]
  %s1 = inlined_call_operand.vmem [shape: bf16[8,32], index: 1, kind: input, shape index: {}]
  %s2 = inlined_call_operand.vmem [shape: f32[1,32], index: 2, kind: input, shape index: {}]
  %s3 = inlined_call_operand.vmem [shape: bf16[32,32], index: 3, kind: input, shape index: {}]
  %s4 = inlined_call_operand.vmem [shape: f32[1,32], index: 4, kind: input, shape index: {}]
  %s5 = inlined_call_operand.vmem [shape: bf16[32,32], index: 5, kind: input, shape index: {}]
  %s6 = inlined_call_operand.vmem [shape: f32[1,32], index: 6, kind: input, shape index: {}]
  %s7 = inlined_call_operand.vmem [shape: bf16[1,32], index: 7, kind: input, shape index: {}]
  %s8 = inlined_call_operand.<no memory space> [shape: f32[1,1], index: 8, kind: input, shape index: {}]
  %s9 = inlined_call_operand.hbm [shape: f32[1,2048], index: 9, kind: output, shape index: {}]
  %s10 = sld [smem:[#allocation0]]
  $region69: #{tpu_custom_call.1} parent=0
    _
  %s12 = ssub.s32 1, %s10
  %s13 = scalar_select 0, %s12, %s10
  %v14 = vstv %s8
  %15 = vst [vmem:[#allocation2] sm:$0x1] %v14
  $region1: #{tpu_custom_call.1} parent=0
    #allocation3 [shape = 'u8[4096]{0}', space=vmem, size = 0x1000, scoped, tag = 'output window, operand 0']
    #allocation4 [shape = 's32[2]{0}', space=sflag, size = 0x8, scoped, tag = 'scoped memory for tpu_custom_call.1']
    %16 = vsyncpa [#allocation4], 0
    %s17 = scalar_lea.sflag [#allocation4], 1
    %18 = vsyncpa %s17, 0
    loop: start=0, step=1, limit=6
    $region2: #{tpu_custom_call.1} parent=1 // loop_pre_header
      _
    $region3: #{tpu_custom_call.1} parent=1 // loop_header
      %s20 = sphi 0, %s24
      %p21 = scmp.ge.s32.totalorder %s20, 6
      %s30 = sphi 0, %s32
      %s33 = sphi 0, %s30
      %s34 = sphi 0, %s33
      %s50 = sphi 0, %s34
      %s54 = sphi 0, %s54
      %s56 = sphi 0, %s54
      %s57 = sphi 0, %s56
      %s71 = sphi 0, %s57
      %s75 = sphi 0, %s75
      %s77 = sphi 0, %s75
      %s78 = sphi 0, %s77
      %s92 = sphi 0, %s78
      %s96 = sphi 0, %s96
      %s98 = sphi 0, %s96
      %s99 = sphi 0, %s98
      %s113 = sphi 0, %s99
      %s117 = sphi 0, %s117
      %s119 = sphi 0, %s117
      %s120 = sphi 0, %s119
      %s134 = sphi 0, %s120
      %s138 = sphi 0, %s138
      %s140 = sphi 0, %s138
      %s141 = sphi 0, %s140
      %s155 = sphi 0, %s141
      %s159 = sphi 0, %s159
      %s161 = sphi 0, %s159
      %s162 = sphi 0, %s161
      %s176 = sphi 0, %s162
      %s180 = sphi 0, %s180
      %s182 = sphi 0, %s180
      %s183 = sphi 0, %s182
      %s197 = sphi 0, %s183
      %s201 = sphi 0, %s201
      %s203 = sphi 0, %s201
      %s204 = sphi 0, %s203
      %s218 = sphi 0, %s204
      %s224 = sphi 0, %s226
      %s227 = sphi 0, %s224
      %s228 = sphi 0, %s227
      %s244 = sphi 0, %s228
    $region4: #{tpu_custom_call.1} parent=1 // loop_header_branch
      %23 = sbr.rel (%p21) target = $region8
    $region5: #{tpu_custom_call.1} parent=1 // loop_body
      %s25 = ssub.s32 %s20, 1
      %s26 = ssub.s32 %s20, 2
      %s27 = sadd.s32 %s20, 1
      %s28 = ssub.s32 %s20, %s27
      %p29 = scmp.eq.s32.totalorder %s28, 0
      %s31 = sadd.s32 %s30, 1
      %s32 = scalar_select %p29, %s30, %s31
      %p35 = pneg %p29
      %p36 = scmp.eq.s32.totalorder %s20, 3
      %p37 = por %p35, %p36
      %p38 = scmp.ne.s32.totalorder %s30, %s33
      %p39 = scmp.eq.s32.totalorder %s20, 0
      %p40 = por %p38, %p39
      %p41 = scmp.ne.s32.totalorder %s30, %s33
      %p42 = scmp.eq.s32.totalorder %s25, 3
      %p43 = por %p41, %p42
      %p44 = scmp.ne.s32.totalorder %s33, %s34
      %p45 = scmp.eq.s32.totalorder %s25, 0
      %p46 = por %p44, %p45
      %p47 = scmp.ne.s32.totalorder %s33, %s34
      %p48 = scmp.eq.s32.totalorder %s26, 3
      %p49 = por %p47, %p48
      %p51 = scmp.ne.s32.totalorder %s34, %s50
      %p52 = scmp.eq.s32.totalorder %s26, 0
      %p53 = por %p51, %p52
      %s55 = sadd.s32 %s54, 1
      %p58 = scmp.eq.s32.totalorder %s20, 3
      %p59 = scmp.ne.s32.totalorder %s54, %s56
      %p60 = scmp.eq.s32.totalorder %s20, 0
      %p61 = por %p59, %p60
      %p62 = scmp.ne.s32.totalorder %s54, %s56
      %p63 = scmp.eq.s32.totalorder %s25, 3
      %p64 = por %p62, %p63
      %p65 = scmp.ne.s32.totalorder %s56, %s57
      %p66 = scmp.eq.s32.totalorder %s25, 0
      %p67 = por %p65, %p66
      %p68 = scmp.ne.s32.totalorder %s56, %s57
      %p69 = scmp.eq.s32.totalorder %s26, 3
      %p70 = por %p68, %p69
      %p72 = scmp.ne.s32.totalorder %s57, %s71
      %p73 = scmp.eq.s32.totalorder %s26, 0
      %p74 = por %p72, %p73
      %s76 = sadd.s32 %s75, 1
      %p79 = scmp.eq.s32.totalorder %s20, 3
      %p80 = scmp.ne.s32.totalorder %s75, %s77
      %p81 = scmp.eq.s32.totalorder %s20, 0
      %p82 = por %p80, %p81
      %p83 = scmp.ne.s32.totalorder %s75, %s77
      %p84 = scmp.eq.s32.totalorder %s25, 3
      %p85 = por %p83, %p84
      %p86 = scmp.ne.s32.totalorder %s77, %s78
      %p87 = scmp.eq.s32.totalorder %s25, 0
      %p88 = por %p86, %p87
      %p89 = scmp.ne.s32.totalorder %s77, %s78
      %p90 = scmp.eq.s32.totalorder %s26, 3
      %p91 = por %p89, %p90
      %p93 = scmp.ne.s32.totalorder %s78, %s92
      %p94 = scmp.eq.s32.totalorder %s26, 0
      %p95 = por %p93, %p94
      %s97 = sadd.s32 %s96, 1
      %p100 = scmp.eq.s32.totalorder %s20, 3
      %p101 = scmp.ne.s32.totalorder %s96, %s98
      %p102 = scmp.eq.s32.totalorder %s20, 0
      %p103 = por %p101, %p102
      %p104 = scmp.ne.s32.totalorder %s96, %s98
      %p105 = scmp.eq.s32.totalorder %s25, 3
      %p106 = por %p104, %p105
      %p107 = scmp.ne.s32.totalorder %s98, %s99
      %p108 = scmp.eq.s32.totalorder %s25, 0
      %p109 = por %p107, %p108
      %p110 = scmp.ne.s32.totalorder %s98, %s99
      %p111 = scmp.eq.s32.totalorder %s26, 3
      %p112 = por %p110, %p111
      %p114 = scmp.ne.s32.totalorder %s99, %s113
      %p115 = scmp.eq.s32.totalorder %s26, 0
      %p116 = por %p114, %p115
      %s118 = sadd.s32 %s117, 1
      %p121 = scmp.eq.s32.totalorder %s20, 3
      %p122 = scmp.ne.s32.totalorder %s117, %s119
      %p123 = scmp.eq.s32.totalorder %s20, 0
      %p124 = por %p122, %p123
      %p125 = scmp.ne.s32.totalorder %s117, %s119
      %p126 = scmp.eq.s32.totalorder %s25, 3
      %p127 = por %p125, %p126
      %p128 = scmp.ne.s32.totalorder %s119, %s120
      %p129 = scmp.eq.s32.totalorder %s25, 0
      %p130 = por %p128, %p129
      %p131 = scmp.ne.s32.totalorder %s119, %s120
      %p132 = scmp.eq.s32.totalorder %s26, 3
      %p133 = por %p131, %p132
      %p135 = scmp.ne.s32.totalorder %s120, %s134
      %p136 = scmp.eq.s32.totalorder %s26, 0
      %p137 = por %p135, %p136
      %s139 = sadd.s32 %s138, 1
      %p142 = scmp.eq.s32.totalorder %s20, 3
      %p143 = scmp.ne.s32.totalorder %s138, %s140
      %p144 = scmp.eq.s32.totalorder %s20, 0
      %p145 = por %p143, %p144
      %p146 = scmp.ne.s32.totalorder %s138, %s140
      %p147 = scmp.eq.s32.totalorder %s25, 3
      %p148 = por %p146, %p147
      %p149 = scmp.ne.s32.totalorder %s140, %s141
      %p150 = scmp.eq.s32.totalorder %s25, 0
      %p151 = por %p149, %p150
      %p152 = scmp.ne.s32.totalorder %s140, %s141
      %p153 = scmp.eq.s32.totalorder %s26, 3
      %p154 = por %p152, %p153
      %p156 = scmp.ne.s32.totalorder %s141, %s155
      %p157 = scmp.eq.s32.totalorder %s26, 0
      %p158 = por %p156, %p157
      %s160 = sadd.s32 %s159, 1
      %p163 = scmp.eq.s32.totalorder %s20, 3
      %p164 = scmp.ne.s32.totalorder %s159, %s161
      %p165 = scmp.eq.s32.totalorder %s20, 0
      %p166 = por %p164, %p165
      %p167 = scmp.ne.s32.totalorder %s159, %s161
      %p168 = scmp.eq.s32.totalorder %s25, 3
      %p169 = por %p167, %p168
      %p170 = scmp.ne.s32.totalorder %s161, %s162
      %p171 = scmp.eq.s32.totalorder %s25, 0
      %p172 = por %p170, %p171
      %p173 = scmp.ne.s32.totalorder %s161, %s162
      %p174 = scmp.eq.s32.totalorder %s26, 3
      %p175 = por %p173, %p174
      %p177 = scmp.ne.s32.totalorder %s162, %s176
      %p178 = scmp.eq.s32.totalorder %s26, 0
      %p179 = por %p177, %p178
      %s181 = sadd.s32 %s180, 1
      %p184 = scmp.eq.s32.totalorder %s20, 3
      %p185 = scmp.ne.s32.totalorder %s180, %s182
      %p186 = scmp.eq.s32.totalorder %s20, 0
      %p187 = por %p185, %p186
      %p188 = scmp.ne.s32.totalorder %s180, %s182
      %p189 = scmp.eq.s32.totalorder %s25, 3
      %p190 = por %p188, %p189
      %p191 = scmp.ne.s32.totalorder %s182, %s183
      %p192 = scmp.eq.s32.totalorder %s25, 0
      %p193 = por %p191, %p192
      %p194 = scmp.ne.s32.totalorder %s182, %s183
      %p195 = scmp.eq.s32.totalorder %s26, 3
      %p196 = por %p194, %p195
      %p198 = scmp.ne.s32.totalorder %s183, %s197
      %p199 = scmp.eq.s32.totalorder %s26, 0
      %p200 = por %p198, %p199
      %s202 = sadd.s32 %s201, 1
      %p205 = scmp.eq.s32.totalorder %s20, 3
      %p206 = scmp.ne.s32.totalorder %s201, %s203
      %p207 = scmp.eq.s32.totalorder %s20, 0
      %p208 = por %p206, %p207
      %p209 = scmp.ne.s32.totalorder %s201, %s203
      %p210 = scmp.eq.s32.totalorder %s25, 3
      %p211 = por %p209, %p210
      %p212 = scmp.ne.s32.totalorder %s203, %s204
      %p213 = scmp.eq.s32.totalorder %s25, 0
      %p214 = por %p212, %p213
      %p215 = scmp.ne.s32.totalorder %s203, %s204
      %p216 = scmp.eq.s32.totalorder %s26, 3
      %p217 = por %p215, %p216
      %p219 = scmp.ne.s32.totalorder %s204, %s218
      %p220 = scmp.eq.s32.totalorder %s26, 0
      %p221 = por %p219, %p220
      %s222 = ssub.s32 %s20, %s27
      %p223 = scmp.eq.s32.totalorder %s222, 0
      %s225 = sadd.s32 %s224, 1
      %s226 = scalar_select %p223, %s224, %s225
      %p229 = pneg %p223
      %p230 = scmp.eq.s32.totalorder %s20, 3
      %p231 = por %p229, %p230
      %p232 = scmp.ne.s32.totalorder %s224, %s227
      %p233 = scmp.eq.s32.totalorder %s20, 0
      %p234 = por %p232, %p233
      %p235 = scmp.ne.s32.totalorder %s224, %s227
      %p236 = scmp.eq.s32.totalorder %s25, 3
      %p237 = por %p235, %p236
      %p238 = scmp.ne.s32.totalorder %s227, %s228
      %p239 = scmp.eq.s32.totalorder %s25, 0
      %p240 = por %p238, %p239
      %p241 = scmp.ne.s32.totalorder %s227, %s228
      %p242 = scmp.eq.s32.totalorder %s26, 3
      %p243 = por %p241, %p242
      %p245 = scmp.ne.s32.totalorder %s228, %s244
      %p246 = scmp.eq.s32.totalorder %s26, 0
      %p247 = por %p245, %p246
      %p248 = scmp.le.s32.totalorder 1, %s20
      %p249 = scmp.lt.s32.totalorder %s20, 5
      %p250 = pnand %p248, %p249
      %p251 = pneg %p250
      // Predicated region
      $region9: #{tpu_custom_call.1} parent=5 // pred_check
        _
      $region10: #{tpu_custom_call.1} parent=5 // pred_check_branch
        %253 = sbr.rel (%p250) target = $region12
      $region11: #{tpu_custom_call.1} parent=5 // pred_region
        %s254 = ssub.s32 %s20, 1
        // Predicated region
        $region13: #{tpu_custom_call.1} parent=11 // pred_check
          %p255 = pneg %p67
        $region14: #{tpu_custom_call.1} parent=11 // pred_check_branch
          %257 = sbr.rel (%p255) target = $region16
        $region15: #{tpu_custom_call.1} parent=11 // pred_region
          _
        $region16: #{tpu_custom_call.1} parent=11 // pred_fallthru
          _
        // Predicated region
        $region17: #{tpu_custom_call.1} parent=11 // pred_check
          %p258 = pneg %p88
        $region18: #{tpu_custom_call.1} parent=11 // pred_check_branch
          %260 = sbr.rel (%p258) target = $region20
        $region19: #{tpu_custom_call.1} parent=11 // pred_region
          _
        $region20: #{tpu_custom_call.1} parent=11 // pred_fallthru
          _
        // Predicated region
        $region21: #{tpu_custom_call.1} parent=11 // pred_check
          %p261 = pneg %p109
        $region22: #{tpu_custom_call.1} parent=11 // pred_check_branch
          %263 = sbr.rel (%p261) target = $region24
        $region23: #{tpu_custom_call.1} parent=11 // pred_region
          _
        $region24: #{tpu_custom_call.1} parent=11 // pred_fallthru
          _
        // Predicated region
        $region25: #{tpu_custom_call.1} parent=11 // pred_check
          %p264 = pneg %p130
        $region26: #{tpu_custom_call.1} parent=11 // pred_check_branch
          %266 = sbr.rel (%p264) target = $region28
        $region27: #{tpu_custom_call.1} parent=11 // pred_region
          _
        $region28: #{tpu_custom_call.1} parent=11 // pred_fallthru
          _
        // Predicated region
        $region29: #{tpu_custom_call.1} parent=11 // pred_check
          %p267 = pneg %p151
        $region30: #{tpu_custom_call.1} parent=11 // pred_check_branch
          %269 = sbr.rel (%p267) target = $region32
        $region31: #{tpu_custom_call.1} parent=11 // pred_region
          _
        $region32: #{tpu_custom_call.1} parent=11 // pred_fallthru
          _
        // Predicated region
        $region33: #{tpu_custom_call.1} parent=11 // pred_check
          %p270 = pneg %p172
        $region34: #{tpu_custom_call.1} parent=11 // pred_check_branch
          %272 = sbr.rel (%p270) target = $region36
        $region35: #{tpu_custom_call.1} parent=11 // pred_region
          _
        $region36: #{tpu_custom_call.1} parent=11 // pred_fallthru
          _
        // Predicated region
        $region37: #{tpu_custom_call.1} parent=11 // pred_check
          %p273 = pneg %p193
        $region38: #{tpu_custom_call.1} parent=11 // pred_check_branch
          %275 = sbr.rel (%p273) target = $region40
        $region39: #{tpu_custom_call.1} parent=11 // pred_region
          _
        $region40: #{tpu_custom_call.1} parent=11 // pred_fallthru
          _
        // Predicated region
        $region41: #{tpu_custom_call.1} parent=11 // pred_check
          %p276 = pneg %p214
        $region42: #{tpu_custom_call.1} parent=11 // pred_check_branch
          %278 = sbr.rel (%p276) target = $region44
        $region43: #{tpu_custom_call.1} parent=11 // pred_region
          _
        $region44: #{tpu_custom_call.1} parent=11 // pred_fallthru
          _
      $region12: #{tpu_custom_call.1} parent=5 // pred_fallthru
        _
      %p279 = scmp.lt.s32.totalorder %s20, 4
      // Predicated region
      $region45: #{tpu_custom_call.1} parent=5 // pred_check
        %p280 = pneg %p279
      $region46: #{tpu_custom_call.1} parent=5 // pred_check_branch
        %282 = sbr.rel (%p280) target = $region48
      $region47: #{tpu_custom_call.1} parent=5 // pred_region
        // Predicated region
        $region49: #{tpu_custom_call.1} parent=47 // pred_check
          %p283 = pneg %p40
        $region50: #{tpu_custom_call.1} parent=47 // pred_check_branch
          %285 = sbr.rel (%p283) target = $region52
        $region51: #{tpu_custom_call.1} parent=47 // pred_region
          %s286 = smul.u32 64, %s20
          %p287 = scmp.lt.s32.totalorder %s286, 255
          %s288 = scalar_select %p287, %s286, 255
          %s289 = smul.addr %s288, 4
          %s290 = scalar_lea.vmem %s0, %s289
          %s291 = smul.u32 64, %s20
        $region52: #{tpu_custom_call.1} parent=47 // pred_fallthru
          _
      $region48: #{tpu_custom_call.1} parent=5 // pred_fallthru
        _
      %p292 = scmp.le.s32.totalorder 1, %s20
      %p293 = scmp.lt.s32.totalorder %s20, 5
      %p294 = pnand %p292, %p293
      %p295 = pneg %p294
      // Predicated region
      $region53: #{tpu_custom_call.1} parent=5 // pred_check
        _
      $region54: #{tpu_custom_call.1} parent=5 // pred_check_branch
        %297 = sbr.rel (%p294) target = $region56
      $region55: #{tpu_custom_call.1} parent=5 // pred_region
        %s298 = ssub.s32 %s20, 1
        %s299 = smul.u32 64, %s25
        %p300 = scmp.lt.s32.totalorder %s299, 255
        %s301 = scalar_select %p300, %s299, 255
        %s302 = smul.addr %s301, 4
        %s303 = scalar_lea.vmem %s0, %s302
        %p304 = pneg %p46
        %p305 = pneg %p43
        %p306 = pneg %p67
        %p307 = pneg %p64
        %p308 = pneg %p88
        %p309 = pneg %p85
        %p310 = pneg %p109
        %p311 = pneg %p106
        %p312 = pneg %p130
        %p313 = pneg %p127
        %p314 = pneg %p151
        %p315 = pneg %p148
        %p316 = pneg %p172
        %p317 = pneg %p169
        %p318 = pneg %p193
        %p319 = pneg %p190
        %p320 = pneg %p214
        %p321 = pneg %p211
        %p322 = pneg %p240
        %p323 = pneg %p237
        %s324 = sand.u32 %s227, 1
        %s325 = scalar_lea.sflag [#allocation4], %s324
        %s326 = sand.u32 %s227, 1
        %s327 = smul.addr %s326, 4
        %s328 = scalar_lea.vmem [#allocation3], %s327
        %s329 = smul.u32 64, %s25
        %p330 = scmp.lt.s32.totalorder %s329, 255
        %s331 = scalar_select %p330, %s329, 255
        %s332 = smul.addr %s331, 4
        %s333 = scalar_lea.vmem %s0, %s332
        %s334 = smul.u32 64, %s25
        %s335 = smul.u32 4, %s25
        %v337 = vld [vmem:[%s333] sm:$0xf]
        %v338 = vld [vmem:[%s333 + $0x4] sm:$0xf]
        %v339 = vld [vmem:[%s333 + $0x8] sm:$0xf]
        %v340 = vld [vmem:[%s333 + $0xc] sm:$0xf]
        %v341 = vld [vmem:[%s333 + $0x10] sm:$0xf]
        %v342 = vld [vmem:[%s333 + $0x14] sm:$0xf]
        %v343 = vld [vmem:[%s333 + $0x18] sm:$0xf]
        %v344 = vld [vmem:[%s333 + $0x1c] sm:$0xf]
        %v345 = vld [vmem:[%s333 + $0x20] sm:$0xf]
        %v346 = vld [vmem:[%s333 + $0x24] sm:$0xf]
        %v347 = vld [vmem:[%s333 + $0x28] sm:$0xf]
        %v348 = vld [vmem:[%s333 + $0x2c] sm:$0xf]
        %v349 = vld [vmem:[%s333 + $0x30] sm:$0xf]
        %v350 = vld [vmem:[%s333 + $0x34] sm:$0xf]
        %v351 = vld [vmem:[%s333 + $0x38] sm:$0xf]
        %v352 = vld [vmem:[%s333 + $0x3c] sm:$0xf]
        %v353 = vld [vmem:[%s333 + $0x40] sm:$0xf]
        %v354 = vld [vmem:[%s333 + $0x44] sm:$0xf]
        %v355 = vld [vmem:[%s333 + $0x48] sm:$0xf]
        %v356 = vld [vmem:[%s333 + $0x4c] sm:$0xf]
        %v357 = vld [vmem:[%s333 + $0x50] sm:$0xf]
        %v358 = vld [vmem:[%s333 + $0x54] sm:$0xf]
        %v359 = vld [vmem:[%s333 + $0x58] sm:$0xf]
        %v360 = vld [vmem:[%s333 + $0x5c] sm:$0xf]
        %v361 = vld [vmem:[%s333 + $0x60] sm:$0xf]
        %v362 = vld [vmem:[%s333 + $0x64] sm:$0xf]
        %v363 = vld [vmem:[%s333 + $0x68] sm:$0xf]
        %v364 = vld [vmem:[%s333 + $0x6c] sm:$0xf]
        %v365 = vld [vmem:[%s333 + $0x70] sm:$0xf]
        %v366 = vld [vmem:[%s333 + $0x74] sm:$0xf]
        %v367 = vld [vmem:[%s333 + $0x78] sm:$0xf]
        %v368 = vld [vmem:[%s333 + $0x7c] sm:$0xf]
        %v369 = vld [vmem:[%s333 + $0x80] sm:$0xf]
        %v370 = vld [vmem:[%s333 + $0x84] sm:$0xf]
        %v371 = vld [vmem:[%s333 + $0x88] sm:$0xf]
        %v372 = vld [vmem:[%s333 + $0x8c] sm:$0xf]
        %v373 = vld [vmem:[%s333 + $0x90] sm:$0xf]
        %v374 = vld [vmem:[%s333 + $0x94] sm:$0xf]
        %v375 = vld [vmem:[%s333 + $0x98] sm:$0xf]
        %v376 = vld [vmem:[%s333 + $0x9c] sm:$0xf]
        %v377 = vld [vmem:[%s333 + $0xa0] sm:$0xf]
        %v378 = vld [vmem:[%s333 + $0xa4] sm:$0xf]
        %v379 = vld [vmem:[%s333 + $0xa8] sm:$0xf]
        %v380 = vld [vmem:[%s333 + $0xac] sm:$0xf]
        %v381 = vld [vmem:[%s333 + $0xb0] sm:$0xf]
        %v382 = vld [vmem:[%s333 + $0xb4] sm:$0xf]
        %v383 = vld [vmem:[%s333 + $0xb8] sm:$0xf]
        %v384 = vld [vmem:[%s333 + $0xbc] sm:$0xf]
        %v385 = vld [vmem:[%s333 + $0xc0] sm:$0xf]
        %v386 = vld [vmem:[%s333 + $0xc4] sm:$0xf]
        %v387 = vld [vmem:[%s333 + $0xc8] sm:$0xf]
        %v388 = vld [vmem:[%s333 + $0xcc] sm:$0xf]
        %v389 = vld [vmem:[%s333 + $0xd0] sm:$0xf]
        %v390 = vld [vmem:[%s333 + $0xd4] sm:$0xf]
        %v391 = vld [vmem:[%s333 + $0xd8] sm:$0xf]
        %v392 = vld [vmem:[%s333 + $0xdc] sm:$0xf]
        %v393 = vld [vmem:[%s333 + $0xe0] sm:$0xf]
        %v394 = vld [vmem:[%s333 + $0xe4] sm:$0xf]
        %v395 = vld [vmem:[%s333 + $0xe8] sm:$0xf]
        %v396 = vld [vmem:[%s333 + $0xec] sm:$0xf]
        %v397 = vld [vmem:[%s333 + $0xf0] sm:$0xf]
        %v398 = vld [vmem:[%s333 + $0xf4] sm:$0xf]
        %v399 = vld [vmem:[%s333 + $0xf8] sm:$0xf]
        %v400 = vld [vmem:[%s333 + $0xfc] sm:$0xf]
        %v401 = vld [vmem:[%s1] sm:$0xf]
        %v402 = vld [vmem:[%s2] sm:$0x1]
        %v404 = vlaneseq
        %v405 = vshrl.u32 %v404, 7
        %v406 = vsub.s32 0, %v405
        %v407 = vrot.slane %v402, %v406
        %v473 = vunpack.c.l.b16 %v337
        %v474 = vunpack.c.l.b16 %v338
        %v475 = vunpack.c.l.b16 %v339
        %v476 = vunpack.c.l.b16 %v340
        %v477 = vunpack.c.l.b16 %v341
        %v478 = vunpack.c.l.b16 %v342
        %v479 = vunpack.c.l.b16 %v343
        %v480 = vunpack.c.l.b16 %v344
        %v481 = vunpack.c.l.b16 %v345
        %v482 = vunpack.c.l.b16 %v346
        %v483 = vunpack.c.l.b16 %v347
        %v484 = vunpack.c.l.b16 %v348
        %v485 = vunpack.c.l.b16 %v349
        %v486 = vunpack.c.l.b16 %v350
        %v487 = vunpack.c.l.b16 %v351
        %v488 = vunpack.c.l.b16 %v352
        %v489 = vunpack.c.l.b16 %v353
        %v490 = vunpack.c.l.b16 %v354
        %v491 = vunpack.c.l.b16 %v355
        %v492 = vunpack.c.l.b16 %v356
        %v493 = vunpack.c.l.b16 %v357
        %v494 = vunpack.c.l.b16 %v358
        %v495 = vunpack.c.l.b16 %v359
        %v496 = vunpack.c.l.b16 %v360
        %v497 = vunpack.c.l.b16 %v361
        %v498 = vunpack.c.l.b16 %v362
        %v499 = vunpack.c.l.b16 %v363
        %v500 = vunpack.c.l.b16 %v364
        %v501 = vunpack.c.l.b16 %v365
        %v502 = vunpack.c.l.b16 %v366
        %v503 = vunpack.c.l.b16 %v367
        %v504 = vunpack.c.l.b16 %v368
        %v505 = vunpack.c.l.b16 %v369
        %v506 = vunpack.c.l.b16 %v370
        %v507 = vunpack.c.l.b16 %v371
        %v508 = vunpack.c.l.b16 %v372
        %v509 = vunpack.c.l.b16 %v373
        %v510 = vunpack.c.l.b16 %v374
        %v511 = vunpack.c.l.b16 %v375
        %v512 = vunpack.c.l.b16 %v376
        %v513 = vunpack.c.l.b16 %v377
        %v514 = vunpack.c.l.b16 %v378
        %v515 = vunpack.c.l.b16 %v379
        %v516 = vunpack.c.l.b16 %v380
        %v517 = vunpack.c.l.b16 %v381
        %v518 = vunpack.c.l.b16 %v382
        %v519 = vunpack.c.l.b16 %v383
        %v520 = vunpack.c.l.b16 %v384
        %v521 = vunpack.c.l.b16 %v385
        %v522 = vunpack.c.l.b16 %v386
        %v523 = vunpack.c.l.b16 %v387
        %v524 = vunpack.c.l.b16 %v388
        %v525 = vunpack.c.l.b16 %v389
        %v526 = vunpack.c.l.b16 %v390
        %v527 = vunpack.c.l.b16 %v391
        %v528 = vunpack.c.l.b16 %v392
        %v529 = vunpack.c.l.b16 %v393
        %v530 = vunpack.c.l.b16 %v394
        %v531 = vunpack.c.l.b16 %v395
        %v532 = vunpack.c.l.b16 %v396
        %v533 = vunpack.c.l.b16 %v397
        %v534 = vunpack.c.l.b16 %v398
        %v535 = vunpack.c.l.b16 %v399
        %v536 = vunpack.c.l.b16 %v400
        %v537 = vpack.c.b16 %v474, %v473
        %v538 = vpack.c.b16 %v476, %v475
        %v539 = vpack.c.b16 %v478, %v477
        %v540 = vpack.c.b16 %v480, %v479
        %v541 = vpack.c.b16 %v482, %v481
        %v542 = vpack.c.b16 %v484, %v483
        %v543 = vpack.c.b16 %v486, %v485
        %v544 = vpack.c.b16 %v488, %v487
        %v545 = vpack.c.b16 %v490, %v489
        %v546 = vpack.c.b16 %v492, %v491
        %v547 = vpack.c.b16 %v494, %v493
        %v548 = vpack.c.b16 %v496, %v495
        %v549 = vpack.c.b16 %v498, %v497
        %v550 = vpack.c.b16 %v500, %v499
        %v551 = vpack.c.b16 %v502, %v501
        %v552 = vpack.c.b16 %v504, %v503
        %v553 = vpack.c.b16 %v506, %v505
        %v554 = vpack.c.b16 %v508, %v507
        %v555 = vpack.c.b16 %v510, %v509
        %v556 = vpack.c.b16 %v512, %v511
        %v557 = vpack.c.b16 %v514, %v513
        %v558 = vpack.c.b16 %v516, %v515
        %v559 = vpack.c.b16 %v518, %v517
        %v560 = vpack.c.b16 %v520, %v519
        %v561 = vpack.c.b16 %v522, %v521
        %v562 = vpack.c.b16 %v524, %v523
        %v563 = vpack.c.b16 %v526, %v525
        %v564 = vpack.c.b16 %v528, %v527
        %v565 = vpack.c.b16 %v530, %v529
        %v566 = vpack.c.b16 %v532, %v531
        %v567 = vpack.c.b16 %v534, %v533
        %v568 = vpack.c.b16 %v536, %v535
        %vm569 = vcmask 64512
        %v571 = vsel %vm569, %v537, 0
        %v574 = vsel %vm569, %v538, 0
        %v577 = vsel %vm569, %v539, 0
        %v580 = vsel %vm569, %v540, 0
        %v583 = vsel %vm569, %v541, 0
        %v586 = vsel %vm569, %v542, 0
        %v589 = vsel %vm569, %v543, 0
        %v592 = vsel %vm569, %v544, 0
        %v595 = vsel %vm569, %v545, 0
        %v598 = vsel %vm569, %v546, 0
        %v601 = vsel %vm569, %v547, 0
        %v604 = vsel %vm569, %v548, 0
        %v607 = vsel %vm569, %v549, 0
        %v610 = vsel %vm569, %v550, 0
        %v613 = vsel %vm569, %v551, 0
        %v616 = vsel %vm569, %v552, 0
        %v619 = vsel %vm569, %v553, 0
        %v622 = vsel %vm569, %v554, 0
        %v625 = vsel %vm569, %v555, 0
        %v628 = vsel %vm569, %v556, 0
        %v631 = vsel %vm569, %v557, 0
        %v634 = vsel %vm569, %v558, 0
        %v637 = vsel %vm569, %v559, 0
        %v640 = vsel %vm569, %v560, 0
        %v643 = vsel %vm569, %v561, 0
        %v646 = vsel %vm569, %v562, 0
        %v649 = vsel %vm569, %v563, 0
        %v652 = vsel %vm569, %v564, 0
        %v655 = vsel %vm569, %v565, 0
        %v658 = vsel %vm569, %v566, 0
        %v661 = vsel %vm569, %v567, 0
        %v664 = vsel %vm569, %v568, 0
        %vm666 = vcmask 1043456
        %v668 = vsel %vm666, %v401, 0
        %670 = vmatprep.subr.bf16.mxu0 0
        %671 = vmatpush1.bf16.msra.mxu0 %v668
        %672 = vmatprep.subr.bf16.mxu0 0
        %673 = vmatpush1.bf16.msra.mxu0 0
        %674 = vmatprep.subr.bf16.mxu0 0
        %675 = vmatpush1.bf16.msra.mxu0 0
        %676 = vmatprep.subr.bf16.mxu0 0
        %677 = vmatpush1.bf16.msra.mxu0 0
        %678 = vmatprep.subr.bf16.mxu0 0
        %679 = vmatpush1.bf16.msra.mxu0 0
        %680 = vmatprep.subr.bf16.mxu0 0
        %681 = vmatpush1.bf16.msra.mxu0 0
        %682 = vmatprep.subr.bf16.mxu0 0
        %683 = vmatpush1.bf16.msra.mxu0 0
        %684 = vmatprep.subr.bf16.mxu0 0
        %685 = vmatpush1.bf16.msra.mxu0 0
        %686 = vmatprep.subr.bf16.mxu0 0
        %687 = vmatpush1.bf16.msra.mxu0 0
        %688 = vmatprep.subr.bf16.mxu0 0
        %689 = vmatpush1.bf16.msra.mxu0 0
        %690 = vmatprep.subr.bf16.mxu0 0
        %691 = vmatpush1.bf16.msra.mxu0 0
        %692 = vmatprep.subr.bf16.mxu0 0
        %693 = vmatpush1.bf16.msra.mxu0 0
        %694 = vmatprep.subr.bf16.mxu0 0
        %695 = vmatpush1.bf16.msra.mxu0 0
        %696 = vmatprep.subr.bf16.mxu0 0
        %697 = vmatpush1.bf16.msra.mxu0 0
        %698 = vmatprep.subr.bf16.mxu0 0
        %699 = vmatpush1.bf16.msra.mxu0 0
        %700 = vmatprep.subr.bf16.mxu0 0
        %701 = vmatpush1.bf16.msra.mxu0 0
        %702 = vmatprep.mubr.bf16.mxu0 0
        %703 = vmatmul.mubr.bf16.gmra.mrb[0].mxu0 %v571
        %v704 = vpop.f32.mrb[0].mxu0
        %v705 = vadd.f32 %v407, %v704
        %v706 = vpop.f32.mrb[0].mxu0
        %v707 = vpop.f32.mrb[0].mxu0
        %v708 = vadd.f32 %v407, %v707
        %v709 = vpop.f32.mrb[0].mxu0
        %710 = vmatprep.mubr.bf16.mxu0 0
        %711 = vmatmul.mubr.bf16.gmra.mrb[0].mxu0 %v574
        %v712 = vpop.f32.mrb[0].mxu0
        %v713 = vadd.f32 %v407, %v712
        %v714 = vpop.f32.mrb[0].mxu0
        %v715 = vpop.f32.mrb[0].mxu0
        %v716 = vadd.f32 %v407, %v715
        %v717 = vpop.f32.mrb[0].mxu0
        %718 = vmatprep.mubr.bf16.mxu0 0
        %719 = vmatmul.mubr.bf16.gmra.mrb[0].mxu0 %v577
        %v720 = vpop.f32.mrb[0].mxu0
        %v721 = vadd.f32 %v407, %v720
        %v722 = vpop.f32.mrb[0].mxu0
        %v723 = vpop.f32.mrb[0].mxu0
        %v724 = vadd.f32 %v407, %v723
        %v725 = vpop.f32.mrb[0].mxu0
        %726 = vmatprep.mubr.bf16.mxu0 0
        %727 = vmatmul.mubr.bf16.gmra.mrb[0].mxu0 %v580
        %v728 = vpop.f32.mrb[0].mxu0
        %v729 = vadd.f32 %v407, %v728
        %v730 = vpop.f32.mrb[0].mxu0
        %v731 = vpop.f32.mrb[0].mxu0
        %v732 = vadd.f32 %v407, %v731
        %v733 = vpop.f32.mrb[0].mxu0
        %734 = vmatprep.mubr.bf16.mxu0 0
        %735 = vmatmul.mubr.bf16.gmra.mrb[0].mxu0 %v583
        %v736 = vpop.f32.mrb[0].mxu0
        %v737 = vadd.f32 %v407, %v736
        %v738 = vpop.f32.mrb[0].mxu0
        %v739 = vpop.f32.mrb[0].mxu0
        %v740 = vadd.f32 %v407, %v739
        %v741 = vpop.f32.mrb[0].mxu0
        %742 = vmatprep.mubr.bf16.mxu0 0
        %743 = vmatmul.mubr.bf16.gmra.mrb[0].mxu0 %v586
        %v744 = vpop.f32.mrb[0].mxu0
        %v745 = vadd.f32 %v407, %v744
        %v746 = vpop.f32.mrb[0].mxu0
        %v747 = vpop.f32.mrb[0].mxu0
        %v748 = vadd.f32 %v407, %v747
        %v749 = vpop.f32.mrb[0].mxu0
        %750 = vmatprep.mubr.bf16.mxu0 0
        %751 = vmatmul.mubr.bf16.gmra.mrb[0].mxu0 %v589
        %v752 = vpop.f32.mrb[0].mxu0
        %v753 = vadd.f32 %v407, %v752
        %v754 = vpop.f32.mrb[0].mxu0
        %v755 = vpop.f32.mrb[0].mxu0
        %v756 = vadd.f32 %v407, %v755
        %v757 = vpop.f32.mrb[0].mxu0
        %758 = vmatprep.mubr.bf16.mxu0 0
        %759 = vmatmul.mubr.bf16.gmra.mrb[0].mxu0 %v592
        %v760 = vpop.f32.mrb[0].mxu0
        %v761 = vadd.f32 %v407, %v760
        %v762 = vpop.f32.mrb[0].mxu0
        %v763 = vpop.f32.mrb[0].mxu0
        %v764 = vadd.f32 %v407, %v763
        %v765 = vpop.f32.mrb[0].mxu0
        %766 = vmatprep.mubr.bf16.mxu0 0
        %767 = vmatmul.mubr.bf16.gmra.mrb[0].mxu0 %v595
        %v768 = vpop.f32.mrb[0].mxu0
        %v769 = vadd.f32 %v407, %v768
        %v770 = vpop.f32.mrb[0].mxu0
        %v771 = vpop.f32.mrb[0].mxu0
        %v772 = vadd.f32 %v407, %v771
        %v773 = vpop.f32.mrb[0].mxu0
        %774 = vmatprep.mubr.bf16.mxu0 0
        %775 = vmatmul.mubr.bf16.gmra.mrb[0].mxu0 %v598
        %v776 = vpop.f32.mrb[0].mxu0
        %v777 = vadd.f32 %v407, %v776
        %v778 = vpop.f32.mrb[0].mxu0
        %v779 = vpop.f32.mrb[0].mxu0
        %v780 = vadd.f32 %v407, %v779
        %v781 = vpop.f32.mrb[0].mxu0
        %782 = vmatprep.mubr.bf16.mxu0 0
        %783 = vmatmul.mubr.bf16.gmra.mrb[0].mxu0 %v601
        %v784 = vpop.f32.mrb[0].mxu0
        %v785 = vadd.f32 %v407, %v784
        %v786 = vpop.f32.mrb[0].mxu0
        %v787 = vpop.f32.mrb[0].mxu0
        %v788 = vadd.f32 %v407, %v787
        %v789 = vpop.f32.mrb[0].mxu0
        %790 = vmatprep.mubr.bf16.mxu0 0
        %791 = vmatmul.mubr.bf16.gmra.mrb[0].mxu0 %v604
        %v792 = vpop.f32.mrb[0].mxu0
        %v793 = vadd.f32 %v407, %v792
        %v794 = vpop.f32.mrb[0].mxu0
        %v795 = vpop.f32.mrb[0].mxu0
        %v796 = vadd.f32 %v407, %v795
        %v797 = vpop.f32.mrb[0].mxu0
        %798 = vmatprep.mubr.bf16.mxu0 0
        %799 = vmatmul.mubr.bf16.gmra.mrb[0].mxu0 %v607
        %v800 = vpop.f32.mrb[0].mxu0
        %v801 = vadd.f32 %v407, %v800
        %v802 = vpop.f32.mrb[0].mxu0
        %v803 = vpop.f32.mrb[0].mxu0
        %v804 = vadd.f32 %v407, %v803
        %v805 = vpop.f32.mrb[0].mxu0
        %806 = vmatprep.mubr.bf16.mxu0 0
        %807 = vmatmul.mubr.bf16.gmra.mrb[0].mxu0 %v610
        %v808 = vpop.f32.mrb[0].mxu0
        %v809 = vadd.f32 %v407, %v808
        %v810 = vpop.f32.mrb[0].mxu0
        %v811 = vpop.f32.mrb[0].mxu0
        %v812 = vadd.f32 %v407, %v811
        %v813 = vpop.f32.mrb[0].mxu0
        %814 = vmatprep.mubr.bf16.mxu0 0
        %815 = vmatmul.mubr.bf16.gmra.mrb[0].mxu0 %v613
        %v816 = vpop.f32.mrb[0].mxu0
        %v817 = vadd.f32 %v407, %v816
        %v818 = vpop.f32.mrb[0].mxu0
        %v819 = vpop.f32.mrb[0].mxu0
        %v820 = vadd.f32 %v407, %v819
        %v821 = vpop.f32.mrb[0].mxu0
        %822 = vmatprep.mubr.bf16.mxu0 0
        %823 = vmatmul.mubr.bf16.gmra.mrb[0].mxu0 %v616
        %v824 = vpop.f32.mrb[0].mxu0
        %v825 = vadd.f32 %v407, %v824
        %v826 = vpop.f32.mrb[0].mxu0
        %v827 = vpop.f32.mrb[0].mxu0
        %v828 = vadd.f32 %v407, %v827
        %v829 = vpop.f32.mrb[0].mxu0
        %830 = vmatprep.mubr.bf16.mxu0 0
        %831 = vmatmul.mubr.bf16.gmra.mrb[0].mxu0 %v619
        %v832 = vpop.f32.mrb[0].mxu0
        %v833 = vadd.f32 %v407, %v832
        %v834 = vpop.f32.mrb[0].mxu0
        %v835 = vpop.f32.mrb[0].mxu0
        %v836 = vadd.f32 %v407, %v835
        %v837 = vpop.f32.mrb[0].mxu0
        %838 = vmatprep.mubr.bf16.mxu0 0
        %839 = vmatmul.mubr.bf16.gmra.mrb[0].mxu0 %v622
        %v840 = vpop.f32.mrb[0].mxu0
        %v841 = vadd.f32 %v407, %v840
        %v842 = vpop.f32.mrb[0].mxu0
        %v843 = vpop.f32.mrb[0].mxu0
        %v844 = vadd.f32 %v407, %v843
        %v845 = vpop.f32.mrb[0].mxu0
        %846 = vmatprep.mubr.bf16.mxu0 0
        %847 = vmatmul.mubr.bf16.gmra.mrb[0].mxu0 %v625
        %v848 = vpop.f32.mrb[0].mxu0
        %v849 = vadd.f32 %v407, %v848
        %v850 = vpop.f32.mrb[0].mxu0
        %v851 = vpop.f32.mrb[0].mxu0
        %v852 = vadd.f32 %v407, %v851
        %v853 = vpop.f32.mrb[0].mxu0
        %854 = vmatprep.mubr.bf16.mxu0 0
        %855 = vmatmul.mubr.bf16.gmra.mrb[0].mxu0 %v628
        %v856 = vpop.f32.mrb[0].mxu0
        %v857 = vadd.f32 %v407, %v856
        %v858 = vpop.f32.mrb[0].mxu0
        %v859 = vpop.f32.mrb[0].mxu0
        %v860 = vadd.f32 %v407, %v859
        %v861 = vpop.f32.mrb[0].mxu0
        %862 = vmatprep.mubr.bf16.mxu0 0
        %863 = vmatmul.mubr.bf16.gmra.mrb[0].mxu0 %v631
        %v864 = vpop.f32.mrb[0].mxu0
        %v865 = vadd.f32 %v407, %v864
        %v866 = vpop.f32.mrb[0].mxu0
        %v867 = vpop.f32.mrb[0].mxu0
        %v868 = vadd.f32 %v407, %v867
        %v869 = vpop.f32.mrb[0].mxu0
        %870 = vmatprep.mubr.bf16.mxu0 0
        %871 = vmatmul.mubr.bf16.gmra.mrb[0].mxu0 %v634
        %v872 = vpop.f32.mrb[0].mxu0
        %v873 = vadd.f32 %v407, %v872
        %v874 = vpop.f32.mrb[0].mxu0
        %v875 = vpop.f32.mrb[0].mxu0
        %v876 = vadd.f32 %v407, %v875
        %v877 = vpop.f32.mrb[0].mxu0
        %878 = vmatprep.mubr.bf16.mxu0 0
        %879 = vmatmul.mubr.bf16.gmra.mrb[0].mxu0 %v637
        %v880 = vpop.f32.mrb[0].mxu0
        %v881 = vadd.f32 %v407, %v880
        %v882 = vpop.f32.mrb[0].mxu0
        %v883 = vpop.f32.mrb[0].mxu0
        %v884 = vadd.f32 %v407, %v883
        %v885 = vpop.f32.mrb[0].mxu0
        %886 = vmatprep.mubr.bf16.mxu0 0
        %887 = vmatmul.mubr.bf16.gmra.mrb[0].mxu0 %v640
        %v888 = vpop.f32.mrb[0].mxu0
        %v889 = vadd.f32 %v407, %v888
        %v890 = vpop.f32.mrb[0].mxu0
        %v891 = vpop.f32.mrb[0].mxu0
        %v892 = vadd.f32 %v407, %v891
        %v893 = vpop.f32.mrb[0].mxu0
        %894 = vmatprep.mubr.bf16.mxu0 0
        %895 = vmatmul.mubr.bf16.gmra.mrb[0].mxu0 %v643
        %v896 = vpop.f32.mrb[0].mxu0
        %v897 = vadd.f32 %v407, %v896
        %v898 = vpop.f32.mrb[0].mxu0
        %v899 = vpop.f32.mrb[0].mxu0
        %v900 = vadd.f32 %v407, %v899
        %v901 = vpop.f32.mrb[0].mxu0
        %902 = vmatprep.mubr.bf16.mxu0 0
        %903 = vmatmul.mubr.bf16.gmra.mrb[0].mxu0 %v646
        %v904 = vpop.f32.mrb[0].mxu0
        %v905 = vadd.f32 %v407, %v904
        %v906 = vpop.f32.mrb[0].mxu0
        %v907 = vpop.f32.mrb[0].mxu0
        %v908 = vadd.f32 %v407, %v907
        %v909 = vpop.f32.mrb[0].mxu0
        %910 = vmatprep.mubr.bf16.mxu0 0
        %911 = vmatmul.mubr.bf16.gmra.mrb[0].mxu0 %v649
        %v912 = vpop.f32.mrb[0].mxu0
        %v913 = vadd.f32 %v407, %v912
        %v914 = vpop.f32.mrb[0].mxu0
        %v915 = vpop.f32.mrb[0].mxu0
        %v916 = vadd.f32 %v407, %v915
        %v917 = vpop.f32.mrb[0].mxu0
        %918 = vmatprep.mubr.bf16.mxu0 0
        %919 = vmatmul.mubr.bf16.gmra.mrb[0].mxu0 %v652
        %v920 = vpop.f32.mrb[0].mxu0
        %v921 = vadd.f32 %v407, %v920
        %v922 = vpop.f32.mrb[0].mxu0
        %v923 = vpop.f32.mrb[0].mxu0
        %v924 = vadd.f32 %v407, %v923
        %v925 = vpop.f32.mrb[0].mxu0
        %926 = vmatprep.mubr.bf16.mxu0 0
        %927 = vmatmul.mubr.bf16.gmra.mrb[0].mxu0 %v655
        %v928 = vpop.f32.mrb[0].mxu0
        %v929 = vadd.f32 %v407, %v928
        %v930 = vpop.f32.mrb[0].mxu0
        %v931 = vpop.f32.mrb[0].mxu0
        %v932 = vadd.f32 %v407, %v931
        %v933 = vpop.f32.mrb[0].mxu0
        %934 = vmatprep.mubr.bf16.mxu0 0
        %935 = vmatmul.mubr.bf16.gmra.mrb[0].mxu0 %v658
        %v936 = vpop.f32.mrb[0].mxu0
        %v937 = vadd.f32 %v407, %v936
        %v938 = vpop.f32.mrb[0].mxu0
        %v939 = vpop.f32.mrb[0].mxu0
        %v940 = vadd.f32 %v407, %v939
        %v941 = vpop.f32.mrb[0].mxu0
        %942 = vmatprep.mubr.bf16.mxu0 0
        %943 = vmatmul.mubr.bf16.gmra.mrb[0].mxu0 %v661
        %v944 = vpop.f32.mrb[0].mxu0
        %v945 = vadd.f32 %v407, %v944
        %v946 = vpop.f32.mrb[0].mxu0
        %v947 = vpop.f32.mrb[0].mxu0
        %v948 = vadd.f32 %v407, %v947
        %v949 = vpop.f32.mrb[0].mxu0
        %950 = vmatprep.mubr.bf16.mxu0 0
        %951 = vmatmul.mubr.bf16.gmra.mrb[0].mxu0 %v664
        %v952 = vpop.f32.mrb[0].mxu0
        %v953 = vadd.f32 %v407, %v952
        %v954 = vpop.f32.mrb[0].mxu0
        %v955 = vpop.f32.mrb[0].mxu0
        %v956 = vadd.f32 %v407, %v955
        %v957 = vpop.f32.mrb[0].mxu0
        %958 = vdwg.mxu0
        %v959 = vmax.f32 %v705, 0.0
        %v960 = vmax.f32 %v708, 0.0
        %v961 = vmax.f32 %v713, 0.0
        %v962 = vmax.f32 %v716, 0.0
        %v963 = vmax.f32 %v721, 0.0
        %v964 = vmax.f32 %v724, 0.0
        %v965 = vmax.f32 %v729, 0.0
        %v966 = vmax.f32 %v732, 0.0
        %v967 = vmax.f32 %v737, 0.0
        %v968 = vmax.f32 %v740, 0.0
        %v969 = vmax.f32 %v745, 0.0
        %v970 = vmax.f32 %v748, 0.0
        %v971 = vmax.f32 %v753, 0.0
        %v972 = vmax.f32 %v756, 0.0
        %v973 = vmax.f32 %v761, 0.0
        %v974 = vmax.f32 %v764, 0.0
        %v975 = vmax.f32 %v769, 0.0
        %v976 = vmax.f32 %v772, 0.0
        %v977 = vmax.f32 %v777, 0.0
        %v978 = vmax.f32 %v780, 0.0
        %v979 = vmax.f32 %v785, 0.0
        %v980 = vmax.f32 %v788, 0.0
        %v981 = vmax.f32 %v793, 0.0
        %v982 = vmax.f32 %v796, 0.0
        %v983 = vmax.f32 %v801, 0.0
        %v984 = vmax.f32 %v804, 0.0
        %v985 = vmax.f32 %v809, 0.0
        %v986 = vmax.f32 %v812, 0.0
        %v987 = vmax.f32 %v817, 0.0
        %v988 = vmax.f32 %v820, 0.0
        %v989 = vmax.f32 %v825, 0.0
        %v990 = vmax.f32 %v828, 0.0
        %v991 = vmax.f32 %v833, 0.0
        %v992 = vmax.f32 %v836, 0.0
        %v993 = vmax.f32 %v841, 0.0
        %v994 = vmax.f32 %v844, 0.0
        %v995 = vmax.f32 %v849, 0.0
        %v996 = vmax.f32 %v852, 0.0
        %v997 = vmax.f32 %v857, 0.0
        %v998 = vmax.f32 %v860, 0.0
        %v999 = vmax.f32 %v865, 0.0
        %v1000 = vmax.f32 %v868, 0.0
        %v1001 = vmax.f32 %v873, 0.0
        %v1002 = vmax.f32 %v876, 0.0
        %v1003 = vmax.f32 %v881, 0.0
        %v1004 = vmax.f32 %v884, 0.0
        %v1005 = vmax.f32 %v889, 0.0
        %v1006 = vmax.f32 %v892, 0.0
        %v1007 = vmax.f32 %v897, 0.0
        %v1008 = vmax.f32 %v900, 0.0
        %v1009 = vmax.f32 %v905, 0.0
        %v1010 = vmax.f32 %v908, 0.0
        %v1011 = vmax.f32 %v913, 0.0
        %v1012 = vmax.f32 %v916, 0.0
        %v1013 = vmax.f32 %v921, 0.0
        %v1014 = vmax.f32 %v924, 0.0
        %v1015 = vmax.f32 %v929, 0.0
        %v1016 = vmax.f32 %v932, 0.0
        %v1017 = vmax.f32 %v937, 0.0
        %v1018 = vmax.f32 %v940, 0.0
        %v1019 = vmax.f32 %v945, 0.0
        %v1020 = vmax.f32 %v948, 0.0
        %v1021 = vmax.f32 %v953, 0.0
        %v1022 = vmax.f32 %v956, 0.0
        %v1023 = vpack.c.bf16 %v960, %v959
        %v1024 = vpack.c.bf16 %v962, %v961
        %v1025 = vpack.c.bf16 %v964, %v963
        %v1026 = vpack.c.bf16 %v966, %v965
        %v1027 = vpack.c.bf16 %v968, %v967
        %v1028 = vpack.c.bf16 %v970, %v969
        %v1029 = vpack.c.bf16 %v972, %v971
        %v1030 = vpack.c.bf16 %v974, %v973
        %v1031 = vpack.c.bf16 %v976, %v975
        %v1032 = vpack.c.bf16 %v978, %v977
        %v1033 = vpack.c.bf16 %v980, %v979
        %v1034 = vpack.c.bf16 %v982, %v981
        %v1035 = vpack.c.bf16 %v984, %v983
        %v1036 = vpack.c.bf16 %v986, %v985
        %v1037 = vpack.c.bf16 %v988, %v987
        %v1038 = vpack.c.bf16 %v990, %v989
        %v1039 = vpack.c.bf16 %v992, %v991
        %v1040 = vpack.c.bf16 %v994, %v993
        %v1041 = vpack.c.bf16 %v996, %v995
        %v1042 = vpack.c.bf16 %v998, %v997
        %v1043 = vpack.c.bf16 %v1000, %v999
        %v1044 = vpack.c.bf16 %v1002, %v1001
        %v1045 = vpack.c.bf16 %v1004, %v1003
        %v1046 = vpack.c.bf16 %v1006, %v1005
        %v1047 = vpack.c.bf16 %v1008, %v1007
        %v1048 = vpack.c.bf16 %v1010, %v1009
        %v1049 = vpack.c.bf16 %v1012, %v1011
        %v1050 = vpack.c.bf16 %v1014, %v1013
        %v1051 = vpack.c.bf16 %v1016, %v1015
        %v1052 = vpack.c.bf16 %v1018, %v1017
        %v1053 = vpack.c.bf16 %v1020, %v1019
        %v1054 = vpack.c.bf16 %v1022, %v1021
        %v1055 = vld [vmem:[%s3] sm:$0xf]
        %v1056 = vld [vmem:[%s3 + $0x4] sm:$0xf]
        %v1057 = vld [vmem:[%s3 + $0x8] sm:$0xf]
        %v1058 = vld [vmem:[%s3 + $0xc] sm:$0xf]
        %v1059 = vld [vmem:[%s4] sm:$0x1]
        %v1061 = vlaneseq
        %v1062 = vshrl.u32 %v1061, 7
        %v1063 = vsub.s32 0, %v1062
        %v1064 = vrot.slane %v1059, %v1063
        %v1070 = vunpack.c.l.b16 %v1055
        %v1071 = vunpack.c.l.b16 %v1056
        %v1072 = vunpack.c.l.b16 %v1057
        %v1073 = vunpack.c.l.b16 %v1058
        %v1074 = vpack.c.b16 %v1071, %v1070
        %v1075 = vpack.c.b16 %v1073, %v1072
        %vm1078 = vcmask 261120
        %v1080 = vsel %vm1078, %v1023, 0
        %v1083 = vsel %vm1078, %v1024, 0
        %v1086 = vsel %vm1078, %v1025, 0
        %v1089 = vsel %vm1078, %v1026, 0
        %v1092 = vsel %vm1078, %v1027, 0
        %v1095 = vsel %vm1078, %v1028, 0
        %v1098 = vsel %vm1078, %v1029, 0
        %v1101 = vsel %vm1078, %v1030, 0
        %v1104 = vsel %vm1078, %v1031, 0
        %v1107 = vsel %vm1078, %v1032, 0
        %v1110 = vsel %vm1078, %v1033, 0
        %v1113 = vsel %vm1078, %v1034, 0
        %v1116 = vsel %vm1078, %v1035, 0
        %v1119 = vsel %vm1078, %v1036, 0
        %v1122 = vsel %vm1078, %v1037, 0
        %v1125 = vsel %vm1078, %v1038, 0
        %v1128 = vsel %vm1078, %v1039, 0
        %v1131 = vsel %vm1078, %v1040, 0
        %v1134 = vsel %vm1078, %v1041, 0
        %v1137 = vsel %vm1078, %v1042, 0
        %v1140 = vsel %vm1078, %v1043, 0
        %v1143 = vsel %vm1078, %v1044, 0
        %v1146 = vsel %vm1078, %v1045, 0
        %v1149 = vsel %vm1078, %v1046, 0
        %v1152 = vsel %vm1078, %v1047, 0
        %v1155 = vsel %vm1078, %v1048, 0
        %v1158 = vsel %vm1078, %v1049, 0
        %v1161 = vsel %vm1078, %v1050, 0
        %v1164 = vsel %vm1078, %v1051, 0
        %v1167 = vsel %vm1078, %v1052, 0
        %v1170 = vsel %vm1078, %v1053, 0
        %v1173 = vsel %vm1078, %v1054, 0
        %1175 = vmatprep.subr.bf16.mxu0 0
        %1176 = vmatpush1.bf16.msra.mxu0 %v1074
        %1177 = vmatprep.subr.bf16.mxu0 0
        %1178 = vmatpush1.bf16.msra.mxu0 %v1075
        %1179 = vmatprep.subr.bf16.mxu0 0
        %1180 = vmatpush1.bf16.msra.mxu0 0
        %1181 = vmatprep.subr.bf16.mxu0 0
        %1182 = vmatpush1.bf16.msra.mxu0 0
        %1183 = vmatprep.subr.bf16.mxu0 0
        %1184 = vmatpush1.bf16.msra.mxu0 0
        %1185 = vmatprep.subr.bf16.mxu0 0
        %1186 = vmatpush1.bf16.msra.mxu0 0
        %1187 = vmatprep.subr.bf16.mxu0 0
        %1188 = vmatpush1.bf16.msra.mxu0 0
        %1189 = vmatprep.subr.bf16.mxu0 0
        %1190 = vmatpush1.bf16.msra.mxu0 0
        %1191 = vmatprep.subr.bf16.mxu0 0
        %1192 = vmatpush1.bf16.msra.mxu0 0
        %1193 = vmatprep.subr.bf16.mxu0 0
        %1194 = vmatpush1.bf16.msra.mxu0 0
        %1195 = vmatprep.subr.bf16.mxu0 0
        %1196 = vmatpush1.bf16.msra.mxu0 0
        %1197 = vmatprep.subr.bf16.mxu0 0
        %1198 = vmatpush1.bf16.msra.mxu0 0
        %1199 = vmatprep.subr.bf16.mxu0 0
        %1200 = vmatpush1.bf16.msra.mxu0 0
        %1201 = vmatprep.subr.bf16.mxu0 0
        %1202 = vmatpush1.bf16.msra.mxu0 0
        %1203 = vmatprep.subr.bf16.mxu0 0
        %1204 = vmatpush1.bf16.msra.mxu0 0
        %1205 = vmatprep.subr.bf16.mxu0 0
        %1206 = vmatpush1.bf16.msra.mxu0 0
        %1207 = vmatprep.mubr.bf16.mxu0 0
        %1208 = vmatmul.mubr.bf16.gmra.mrb[0].mxu0 %v1080
        %v1209 = vpop.f32.mrb[0].mxu0
        %v1210 = vadd.f32 %v1064, %v1209
        %v1211 = vpop.f32.mrb[0].mxu0
        %v1212 = vpop.f32.mrb[0].mxu0
        %v1213 = vadd.f32 %v1064, %v1212
        %v1214 = vpop.f32.mrb[0].mxu0
        %1215 = vmatprep.mubr.bf16.mxu0 0
        %1216 = vmatmul.mubr.bf16.gmra.mrb[0].mxu0 %v1083
        %v1217 = vpop.f32.mrb[0].mxu0
        %v1218 = vadd.f32 %v1064, %v1217
        %v1219 = vpop.f32.mrb[0].mxu0
        %v1220 = vpop.f32.mrb[0].mxu0
        %v1221 = vadd.f32 %v1064, %v1220
        %v1222 = vpop.f32.mrb[0].mxu0
        %1223 = vmatprep.mubr.bf16.mxu0 0
        %1224 = vmatmul.mubr.bf16.gmra.mrb[0].mxu0 %v1086
        %v1225 = vpop.f32.mrb[0].mxu0
        %v1226 = vadd.f32 %v1064, %v1225
        %v1227 = vpop.f32.mrb[0].mxu0
        %v1228 = vpop.f32.mrb[0].mxu0
        %v1229 = vadd.f32 %v1064, %v1228
        %v1230 = vpop.f32.mrb[0].mxu0
        %1231 = vmatprep.mubr.bf16.mxu0 0
        %1232 = vmatmul.mubr.bf16.gmra.mrb[0].mxu0 %v1089
        %v1233 = vpop.f32.mrb[0].mxu0
        %v1234 = vadd.f32 %v1064, %v1233
        %v1235 = vpop.f32.mrb[0].mxu0
        %v1236 = vpop.f32.mrb[0].mxu0
        %v1237 = vadd.f32 %v1064, %v1236
        %v1238 = vpop.f32.mrb[0].mxu0
        %1239 = vmatprep.mubr.bf16.mxu0 0
        %1240 = vmatmul.mubr.bf16.gmra.mrb[0].mxu0 %v1092
        %v1241 = vpop.f32.mrb[0].mxu0
        %v1242 = vadd.f32 %v1064, %v1241
        %v1243 = vpop.f32.mrb[0].mxu0
        %v1244 = vpop.f32.mrb[0].mxu0
        %v1245 = vadd.f32 %v1064, %v1244
        %v1246 = vpop.f32.mrb[0].mxu0
        %1247 = vmatprep.mubr.bf16.mxu0 0
        %1248 = vmatmul.mubr.bf16.gmra.mrb[0].mxu0 %v1095
        %v1249 = vpop.f32.mrb[0].mxu0
        %v1250 = vadd.f32 %v1064, %v1249
        %v1251 = vpop.f32.mrb[0].mxu0
        %v1252 = vpop.f32.mrb[0].mxu0
        %v1253 = vadd.f32 %v1064, %v1252
        %v1254 = vpop.f32.mrb[0].mxu0
        %1255 = vmatprep.mubr.bf16.mxu0 0
        %1256 = vmatmul.mubr.bf16.gmra.mrb[0].mxu0 %v1098
        %v1257 = vpop.f32.mrb[0].mxu0
        %v1258 = vadd.f32 %v1064, %v1257
        %v1259 = vpop.f32.mrb[0].mxu0
        %v1260 = vpop.f32.mrb[0].mxu0
        %v1261 = vadd.f32 %v1064, %v1260
        %v1262 = vpop.f32.mrb[0].mxu0
        %1263 = vmatprep.mubr.bf16.mxu0 0
        %1264 = vmatmul.mubr.bf16.gmra.mrb[0].mxu0 %v1101
        %v1265 = vpop.f32.mrb[0].mxu0
        %v1266 = vadd.f32 %v1064, %v1265
        %v1267 = vpop.f32.mrb[0].mxu0
        %v1268 = vpop.f32.mrb[0].mxu0
        %v1269 = vadd.f32 %v1064, %v1268
        %v1270 = vpop.f32.mrb[0].mxu0
        %1271 = vmatprep.mubr.bf16.mxu0 0
        %1272 = vmatmul.mubr.bf16.gmra.mrb[0].mxu0 %v1104
        %v1273 = vpop.f32.mrb[0].mxu0
        %v1274 = vadd.f32 %v1064, %v1273
        %v1275 = vpop.f32.mrb[0].mxu0
        %v1276 = vpop.f32.mrb[0].mxu0
        %v1277 = vadd.f32 %v1064, %v1276
        %v1278 = vpop.f32.mrb[0].mxu0
        %1279 = vmatprep.mubr.bf16.mxu0 0
        %1280 = vmatmul.mubr.bf16.gmra.mrb[0].mxu0 %v1107
        %v1281 = vpop.f32.mrb[0].mxu0
        %v1282 = vadd.f32 %v1064, %v1281
        %v1283 = vpop.f32.mrb[0].mxu0
        %v1284 = vpop.f32.mrb[0].mxu0
        %v1285 = vadd.f32 %v1064, %v1284
        %v1286 = vpop.f32.mrb[0].mxu0
        %1287 = vmatprep.mubr.bf16.mxu0 0
        %1288 = vmatmul.mubr.bf16.gmra.mrb[0].mxu0 %v1110
        %v1289 = vpop.f32.mrb[0].mxu0
        %v1290 = vadd.f32 %v1064, %v1289
        %v1291 = vpop.f32.mrb[0].mxu0
        %v1292 = vpop.f32.mrb[0].mxu0
        %v1293 = vadd.f32 %v1064, %v1292
        %v1294 = vpop.f32.mrb[0].mxu0
        %1295 = vmatprep.mubr.bf16.mxu0 0
        %1296 = vmatmul.mubr.bf16.gmra.mrb[0].mxu0 %v1113
        %v1297 = vpop.f32.mrb[0].mxu0
        %v1298 = vadd.f32 %v1064, %v1297
        %v1299 = vpop.f32.mrb[0].mxu0
        %v1300 = vpop.f32.mrb[0].mxu0
        %v1301 = vadd.f32 %v1064, %v1300
        %v1302 = vpop.f32.mrb[0].mxu0
        %1303 = vmatprep.mubr.bf16.mxu0 0
        %1304 = vmatmul.mubr.bf16.gmra.mrb[0].mxu0 %v1116
        %v1305 = vpop.f32.mrb[0].mxu0
        %v1306 = vadd.f32 %v1064, %v1305
        %v1307 = vpop.f32.mrb[0].mxu0
        %v1308 = vpop.f32.mrb[0].mxu0
        %v1309 = vadd.f32 %v1064, %v1308
        %v1310 = vpop.f32.mrb[0].mxu0
        %1311 = vmatprep.mubr.bf16.mxu0 0
        %1312 = vmatmul.mubr.bf16.gmra.mrb[0].mxu0 %v1119
        %v1313 = vpop.f32.mrb[0].mxu0
        %v1314 = vadd.f32 %v1064, %v1313
        %v1315 = vpop.f32.mrb[0].mxu0
        %v1316 = vpop.f32.mrb[0].mxu0
        %v1317 = vadd.f32 %v1064, %v1316
        %v1318 = vpop.f32.mrb[0].mxu0
        %1319 = vmatprep.mubr.bf16.mxu0 0
        %1320 = vmatmul.mubr.bf16.gmra.mrb[0].mxu0 %v1122
        %v1321 = vpop.f32.mrb[0].mxu0
        %v1322 = vadd.f32 %v1064, %v1321
        %v1323 = vpop.f32.mrb[0].mxu0
        %v1324 = vpop.f32.mrb[0].mxu0
        %v1325 = vadd.f32 %v1064, %v1324
        %v1326 = vpop.f32.mrb[0].mxu0
        %1327 = vmatprep.mubr.bf16.mxu0 0
        %1328 = vmatmul.mubr.bf16.gmra.mrb[0].mxu0 %v1125
        %v1329 = vpop.f32.mrb[0].mxu0
        %v1330 = vadd.f32 %v1064, %v1329
        %v1331 = vpop.f32.mrb[0].mxu0
        %v1332 = vpop.f32.mrb[0].mxu0
        %v1333 = vadd.f32 %v1064, %v1332
        %v1334 = vpop.f32.mrb[0].mxu0
        %1335 = vmatprep.mubr.bf16.mxu0 0
        %1336 = vmatmul.mubr.bf16.gmra.mrb[0].mxu0 %v1128
        %v1337 = vpop.f32.mrb[0].mxu0
        %v1338 = vadd.f32 %v1064, %v1337
        %v1339 = vpop.f32.mrb[0].mxu0
        %v1340 = vpop.f32.mrb[0].mxu0
        %v1341 = vadd.f32 %v1064, %v1340
        %v1342 = vpop.f32.mrb[0].mxu0
        %1343 = vmatprep.mubr.bf16.mxu0 0
        %1344 = vmatmul.mubr.bf16.gmra.mrb[0].mxu0 %v1131
        %v1345 = vpop.f32.mrb[0].mxu0
        %v1346 = vadd.f32 %v1064, %v1345
        %v1347 = vpop.f32.mrb[0].mxu0
        %v1348 = vpop.f32.mrb[0].mxu0
        %v1349 = vadd.f32 %v1064, %v1348
        %v1350 = vpop.f32.mrb[0].mxu0
        %1351 = vmatprep.mubr.bf16.mxu0 0
        %1352 = vmatmul.mubr.bf16.gmra.mrb[0].mxu0 %v1134
        %v1353 = vpop.f32.mrb[0].mxu0
        %v1354 = vadd.f32 %v1064, %v1353
        %v1355 = vpop.f32.mrb[0].mxu0
        %v1356 = vpop.f32.mrb[0].mxu0
        %v1357 = vadd.f32 %v1064, %v1356
        %v1358 = vpop.f32.mrb[0].mxu0
        %1359 = vmatprep.mubr.bf16.mxu0 0
        %1360 = vmatmul.mubr.bf16.gmra.mrb[0].mxu0 %v1137
        %v1361 = vpop.f32.mrb[0].mxu0
        %v1362 = vadd.f32 %v1064, %v1361
        %v1363 = vpop.f32.mrb[0].mxu0
        %v1364 = vpop.f32.mrb[0].mxu0
        %v1365 = vadd.f32 %v1064, %v1364
        %v1366 = vpop.f32.mrb[0].mxu0
        %1367 = vmatprep.mubr.bf16.mxu0 0
        %1368 = vmatmul.mubr.bf16.gmra.mrb[0].mxu0 %v1140
        %v1369 = vpop.f32.mrb[0].mxu0
        %v1370 = vadd.f32 %v1064, %v1369
        %v1371 = vpop.f32.mrb[0].mxu0
        %v1372 = vpop.f32.mrb[0].mxu0
        %v1373 = vadd.f32 %v1064, %v1372
        %v1374 = vpop.f32.mrb[0].mxu0
        %1375 = vmatprep.mubr.bf16.mxu0 0
        %1376 = vmatmul.mubr.bf16.gmra.mrb[0].mxu0 %v1143
        %v1377 = vpop.f32.mrb[0].mxu0
        %v1378 = vadd.f32 %v1064, %v1377
        %v1379 = vpop.f32.mrb[0].mxu0
        %v1380 = vpop.f32.mrb[0].mxu0
        %v1381 = vadd.f32 %v1064, %v1380
        %v1382 = vpop.f32.mrb[0].mxu0
        %1383 = vmatprep.mubr.bf16.mxu0 0
        %1384 = vmatmul.mubr.bf16.gmra.mrb[0].mxu0 %v1146
        %v1385 = vpop.f32.mrb[0].mxu0
        %v1386 = vadd.f32 %v1064, %v1385
        %v1387 = vpop.f32.mrb[0].mxu0
        %v1388 = vpop.f32.mrb[0].mxu0
        %v1389 = vadd.f32 %v1064, %v1388
        %v1390 = vpop.f32.mrb[0].mxu0
        %1391 = vmatprep.mubr.bf16.mxu0 0
        %1392 = vmatmul.mubr.bf16.gmra.mrb[0].mxu0 %v1149
        %v1393 = vpop.f32.mrb[0].mxu0
        %v1394 = vadd.f32 %v1064, %v1393
        %v1395 = vpop.f32.mrb[0].mxu0
        %v1396 = vpop.f32.mrb[0].mxu0
        %v1397 = vadd.f32 %v1064, %v1396
        %v1398 = vpop.f32.mrb[0].mxu0
        %1399 = vmatprep.mubr.bf16.mxu0 0
        %1400 = vmatmul.mubr.bf16.gmra.mrb[0].mxu0 %v1152
        %v1401 = vpop.f32.mrb[0].mxu0
        %v1402 = vadd.f32 %v1064, %v1401
        %v1403 = vpop.f32.mrb[0].mxu0
        %v1404 = vpop.f32.mrb[0].mxu0
        %v1405 = vadd.f32 %v1064, %v1404
        %v1406 = vpop.f32.mrb[0].mxu0
        %1407 = vmatprep.mubr.bf16.mxu0 0
        %1408 = vmatmul.mubr.bf16.gmra.mrb[0].mxu0 %v1155
        %v1409 = vpop.f32.mrb[0].mxu0
        %v1410 = vadd.f32 %v1064, %v1409
        %v1411 = vpop.f32.mrb[0].mxu0
        %v1412 = vpop.f32.mrb[0].mxu0
        %v1413 = vadd.f32 %v1064, %v1412
        %v1414 = vpop.f32.mrb[0].mxu0
        %1415 = vmatprep.mubr.bf16.mxu0 0
        %1416 = vmatmul.mubr.bf16.gmra.mrb[0].mxu0 %v1158
        %v1417 = vpop.f32.mrb[0].mxu0
        %v1418 = vadd.f32 %v1064, %v1417
        %v1419 = vpop.f32.mrb[0].mxu0
        %v1420 = vpop.f32.mrb[0].mxu0
        %v1421 = vadd.f32 %v1064, %v1420
        %v1422 = vpop.f32.mrb[0].mxu0
        %1423 = vmatprep.mubr.bf16.mxu0 0
        %1424 = vmatmul.mubr.bf16.gmra.mrb[0].mxu0 %v1161
        %v1425 = vpop.f32.mrb[0].mxu0
        %v1426 = vadd.f32 %v1064, %v1425
        %v1427 = vpop.f32.mrb[0].mxu0
        %v1428 = vpop.f32.mrb[0].mxu0
        %v1429 = vadd.f32 %v1064, %v1428
        %v1430 = vpop.f32.mrb[0].mxu0
        %1431 = vmatprep.mubr.bf16.mxu0 0
        %1432 = vmatmul.mubr.bf16.gmra.mrb[0].mxu0 %v1164
        %v1433 = vpop.f32.mrb[0].mxu0
        %v1434 = vadd.f32 %v1064, %v1433
        %v1435 = vpop.f32.mrb[0].mxu0
        %v1436 = vpop.f32.mrb[0].mxu0
        %v1437 = vadd.f32 %v1064, %v1436
        %v1438 = vpop.f32.mrb[0].mxu0
        %1439 = vmatprep.mubr.bf16.mxu0 0
        %1440 = vmatmul.mubr.bf16.gmra.mrb[0].mxu0 %v1167
        %v1441 = vpop.f32.mrb[0].mxu0
        %v1442 = vadd.f32 %v1064, %v1441
        %v1443 = vpop.f32.mrb[0].mxu0
        %v1444 = vpop.f32.mrb[0].mxu0
        %v1445 = vadd.f32 %v1064, %v1444
        %v1446 = vpop.f32.mrb[0].mxu0
        %1447 = vmatprep.mubr.bf16.mxu0 0
        %1448 = vmatmul.mubr.bf16.gmra.mrb[0].mxu0 %v1170
        %v1449 = vpop.f32.mrb[0].mxu0
        %v1450 = vadd.f32 %v1064, %v1449
        %v1451 = vpop.f32.mrb[0].mxu0
        %v1452 = vpop.f32.mrb[0].mxu0
        %v1453 = vadd.f32 %v1064, %v1452
        %v1454 = vpop.f32.mrb[0].mxu0
        %1455 = vmatprep.mubr.bf16.mxu0 0
        %1456 = vmatmul.mubr.bf16.gmra.mrb[0].mxu0 %v1173
        %v1457 = vpop.f32.mrb[0].mxu0
        %v1458 = vadd.f32 %v1064, %v1457
        %v1459 = vpop.f32.mrb[0].mxu0
        %v1460 = vpop.f32.mrb[0].mxu0
        %v1461 = vadd.f32 %v1064, %v1460
        %v1462 = vpop.f32.mrb[0].mxu0
        %1463 = vdwg.mxu0
        %v1464 = vmax.f32 %v1210, 0.0
        %v1465 = vmax.f32 %v1213, 0.0
        %v1466 = vmax.f32 %v1218, 0.0
        %v1467 = vmax.f32 %v1221, 0.0
        %v1468 = vmax.f32 %v1226, 0.0
        %v1469 = vmax.f32 %v1229, 0.0
        %v1470 = vmax.f32 %v1234, 0.0
        %v1471 = vmax.f32 %v1237, 0.0
        %v1472 = vmax.f32 %v1242, 0.0
        %v1473 = vmax.f32 %v1245, 0.0
        %v1474 = vmax.f32 %v1250, 0.0
        %v1475 = vmax.f32 %v1253, 0.0
        %v1476 = vmax.f32 %v1258, 0.0
        %v1477 = vmax.f32 %v1261, 0.0
        %v1478 = vmax.f32 %v1266, 0.0
        %v1479 = vmax.f32 %v1269, 0.0
        %v1480 = vmax.f32 %v1274, 0.0
        %v1481 = vmax.f32 %v1277, 0.0
        %v1482 = vmax.f32 %v1282, 0.0
        %v1483 = vmax.f32 %v1285, 0.0
        %v1484 = vmax.f32 %v1290, 0.0
        %v1485 = vmax.f32 %v1293, 0.0
        %v1486 = vmax.f32 %v1298, 0.0
        %v1487 = vmax.f32 %v1301, 0.0
        %v1488 = vmax.f32 %v1306, 0.0
        %v1489 = vmax.f32 %v1309, 0.0
        %v1490 = vmax.f32 %v1314, 0.0
        %v1491 = vmax.f32 %v1317, 0.0
        %v1492 = vmax.f32 %v1322, 0.0
        %v1493 = vmax.f32 %v1325, 0.0
        %v1494 = vmax.f32 %v1330, 0.0
        %v1495 = vmax.f32 %v1333, 0.0
        %v1496 = vmax.f32 %v1338, 0.0
        %v1497 = vmax.f32 %v1341, 0.0
        %v1498 = vmax.f32 %v1346, 0.0
        %v1499 = vmax.f32 %v1349, 0.0
        %v1500 = vmax.f32 %v1354, 0.0
        %v1501 = vmax.f32 %v1357, 0.0
        %v1502 = vmax.f32 %v1362, 0.0
        %v1503 = vmax.f32 %v1365, 0.0
        %v1504 = vmax.f32 %v1370, 0.0
        %v1505 = vmax.f32 %v1373, 0.0
        %v1506 = vmax.f32 %v1378, 0.0
        %v1507 = vmax.f32 %v1381, 0.0
        %v1508 = vmax.f32 %v1386, 0.0
        %v1509 = vmax.f32 %v1389, 0.0
        %v1510 = vmax.f32 %v1394, 0.0
        %v1511 = vmax.f32 %v1397, 0.0
        %v1512 = vmax.f32 %v1402, 0.0
        %v1513 = vmax.f32 %v1405, 0.0
        %v1514 = vmax.f32 %v1410, 0.0
        %v1515 = vmax.f32 %v1413, 0.0
        %v1516 = vmax.f32 %v1418, 0.0
        %v1517 = vmax.f32 %v1421, 0.0
        %v1518 = vmax.f32 %v1426, 0.0
        %v1519 = vmax.f32 %v1429, 0.0
        %v1520 = vmax.f32 %v1434, 0.0
        %v1521 = vmax.f32 %v1437, 0.0
        %v1522 = vmax.f32 %v1442, 0.0
        %v1523 = vmax.f32 %v1445, 0.0
        %v1524 = vmax.f32 %v1450, 0.0
        %v1525 = vmax.f32 %v1453, 0.0
        %v1526 = vmax.f32 %v1458, 0.0
        %v1527 = vmax.f32 %v1461, 0.0
        %v1528 = vpack.c.bf16 %v1465, %v1464
        %v1529 = vpack.c.bf16 %v1467, %v1466
        %v1530 = vpack.c.bf16 %v1469, %v1468
        %v1531 = vpack.c.bf16 %v1471, %v1470
        %v1532 = vpack.c.bf16 %v1473, %v1472
        %v1533 = vpack.c.bf16 %v1475, %v1474
        %v1534 = vpack.c.bf16 %v1477, %v1476
        %v1535 = vpack.c.bf16 %v1479, %v1478
        %v1536 = vpack.c.bf16 %v1481, %v1480
        %v1537 = vpack.c.bf16 %v1483, %v1482
        %v1538 = vpack.c.bf16 %v1485, %v1484
        %v1539 = vpack.c.bf16 %v1487, %v1486
        %v1540 = vpack.c.bf16 %v1489, %v1488
        %v1541 = vpack.c.bf16 %v1491, %v1490
        %v1542 = vpack.c.bf16 %v1493, %v1492
        %v1543 = vpack.c.bf16 %v1495, %v1494
        %v1544 = vpack.c.bf16 %v1497, %v1496
        %v1545 = vpack.c.bf16 %v1499, %v1498
        %v1546 = vpack.c.bf16 %v1501, %v1500
        %v1547 = vpack.c.bf16 %v1503, %v1502
        %v1548 = vpack.c.bf16 %v1505, %v1504
        %v1549 = vpack.c.bf16 %v1507, %v1506
        %v1550 = vpack.c.bf16 %v1509, %v1508
        %v1551 = vpack.c.bf16 %v1511, %v1510
        %v1552 = vpack.c.bf16 %v1513, %v1512
        %v1553 = vpack.c.bf16 %v1515, %v1514
        %v1554 = vpack.c.bf16 %v1517, %v1516
        %v1555 = vpack.c.bf16 %v1519, %v1518
        %v1556 = vpack.c.bf16 %v1521, %v1520
        %v1557 = vpack.c.bf16 %v1523, %v1522
        %v1558 = vpack.c.bf16 %v1525, %v1524
        %v1559 = vpack.c.bf16 %v1527, %v1526
        %v1560 = vld [vmem:[%s5] sm:$0xf]
        %v1561 = vld [vmem:[%s5 + $0x4] sm:$0xf]
        %v1562 = vld [vmem:[%s5 + $0x8] sm:$0xf]
        %v1563 = vld [vmem:[%s5 + $0xc] sm:$0xf]
        %v1564 = vld [vmem:[%s6] sm:$0x1]
        %v1566 = vlaneseq
        %v1567 = vshrl.u32 %v1566, 7
        %v1568 = vsub.s32 0, %v1567
        %v1569 = vrot.slane %v1564, %v1568
        %v1575 = vunpack.c.l.b16 %v1560
        %v1576 = vunpack.c.l.b16 %v1561
        %v1577 = vunpack.c.l.b16 %v1562
        %v1578 = vunpack.c.l.b16 %v1563
        %v1579 = vpack.c.b16 %v1576, %v1575
        %v1580 = vpack.c.b16 %v1578, %v1577
        %v1584 = vsel %vm1078, %v1528, 0
        %v1587 = vsel %vm1078, %v1529, 0
        %v1590 = vsel %vm1078, %v1530, 0
        %v1593 = vsel %vm1078, %v1531, 0
        %v1596 = vsel %vm1078, %v1532, 0
        %v1599 = vsel %vm1078, %v1533, 0
        %v1602 = vsel %vm1078, %v1534, 0
        %v1605 = vsel %vm1078, %v1535, 0
        %v1608 = vsel %vm1078, %v1536, 0
        %v1611 = vsel %vm1078, %v1537, 0
        %v1614 = vsel %vm1078, %v1538, 0
        %v1617 = vsel %vm1078, %v1539, 0
        %v1620 = vsel %vm1078, %v1540, 0
        %v1623 = vsel %vm1078, %v1541, 0
        %v1626 = vsel %vm1078, %v1542, 0
        %v1629 = vsel %vm1078, %v1543, 0
        %v1632 = vsel %vm1078, %v1544, 0
        %v1635 = vsel %vm1078, %v1545, 0
        %v1638 = vsel %vm1078, %v1546, 0
        %v1641 = vsel %vm1078, %v1547, 0
        %v1644 = vsel %vm1078, %v1548, 0
        %v1647 = vsel %vm1078, %v1549, 0
        %v1650 = vsel %vm1078, %v1550, 0
        %v1653 = vsel %vm1078, %v1551, 0
        %v1656 = vsel %vm1078, %v1552, 0
        %v1659 = vsel %vm1078, %v1553, 0
        %v1662 = vsel %vm1078, %v1554, 0
        %v1665 = vsel %vm1078, %v1555, 0
        %v1668 = vsel %vm1078, %v1556, 0
        %v1671 = vsel %vm1078, %v1557, 0
        %v1674 = vsel %vm1078, %v1558, 0
        %v1677 = vsel %vm1078, %v1559, 0
        %1679 = vmatprep.subr.bf16.mxu0 0
        %1680 = vmatpush1.bf16.msra.mxu0 %v1579
        %1681 = vmatprep.subr.bf16.mxu0 0
        %1682 = vmatpush1.bf16.msra.mxu0 %v1580
        %1683 = vmatprep.subr.bf16.mxu0 0
        %1684 = vmatpush1.bf16.msra.mxu0 0
        %1685 = vmatprep.subr.bf16.mxu0 0
        %1686 = vmatpush1.bf16.msra.mxu0 0
        %1687 = vmatprep.subr.bf16.mxu0 0
        %1688 = vmatpush1.bf16.msra.mxu0 0
        %1689 = vmatprep.subr.bf16.mxu0 0
        %1690 = vmatpush1.bf16.msra.mxu0 0
        %1691 = vmatprep.subr.bf16.mxu0 0
        %1692 = vmatpush1.bf16.msra.mxu0 0
        %1693 = vmatprep.subr.bf16.mxu0 0
        %1694 = vmatpush1.bf16.msra.mxu0 0
        %1695 = vmatprep.subr.bf16.mxu0 0
        %1696 = vmatpush1.bf16.msra.mxu0 0
        %1697 = vmatprep.subr.bf16.mxu0 0
        %1698 = vmatpush1.bf16.msra.mxu0 0
        %1699 = vmatprep.subr.bf16.mxu0 0
        %1700 = vmatpush1.bf16.msra.mxu0 0
        %1701 = vmatprep.subr.bf16.mxu0 0
        %1702 = vmatpush1.bf16.msra.mxu0 0
        %1703 = vmatprep.subr.bf16.mxu0 0
        %1704 = vmatpush1.bf16.msra.mxu0 0
        %1705 = vmatprep.subr.bf16.mxu0 0
        %1706 = vmatpush1.bf16.msra.mxu0 0
        %1707 = vmatprep.subr.bf16.mxu0 0
        %1708 = vmatpush1.bf16.msra.mxu0 0
        %1709 = vmatprep.subr.bf16.mxu0 0
        %1710 = vmatpush1.bf16.msra.mxu0 0
        %1711 = vmatprep.mubr.bf16.mxu0 0
        %1712 = vmatmul.mubr.bf16.gmra.mrb[0].mxu0 %v1584
        %v1713 = vpop.f32.mrb[0].mxu0
        %v1714 = vadd.f32 %v1569, %v1713
        %v1715 = vpop.f32.mrb[0].mxu0
        %v1716 = vpop.f32.mrb[0].mxu0
        %v1717 = vadd.f32 %v1569, %v1716
        %v1718 = vpop.f32.mrb[0].mxu0
        %1719 = vmatprep.mubr.bf16.mxu0 0
        %1720 = vmatmul.mubr.bf16.gmra.mrb[0].mxu0 %v1587
        %v1721 = vpop.f32.mrb[0].mxu0
        %v1722 = vadd.f32 %v1569, %v1721
        %v1723 = vpop.f32.mrb[0].mxu0
        %v1724 = vpop.f32.mrb[0].mxu0
        %v1725 = vadd.f32 %v1569, %v1724
        %v1726 = vpop.f32.mrb[0].mxu0
        %1727 = vmatprep.mubr.bf16.mxu0 0
        %1728 = vmatmul.mubr.bf16.gmra.mrb[0].mxu0 %v1590
        %v1729 = vpop.f32.mrb[0].mxu0
        %v1730 = vadd.f32 %v1569, %v1729
        %v1731 = vpop.f32.mrb[0].mxu0
        %v1732 = vpop.f32.mrb[0].mxu0
        %v1733 = vadd.f32 %v1569, %v1732
        %v1734 = vpop.f32.mrb[0].mxu0
        %1735 = vmatprep.mubr.bf16.mxu0 0
        %1736 = vmatmul.mubr.bf16.gmra.mrb[0].mxu0 %v1593
        %v1737 = vpop.f32.mrb[0].mxu0
        %v1738 = vadd.f32 %v1569, %v1737
        %v1739 = vpop.f32.mrb[0].mxu0
        %v1740 = vpop.f32.mrb[0].mxu0
        %v1741 = vadd.f32 %v1569, %v1740
        %v1742 = vpop.f32.mrb[0].mxu0
        %1743 = vmatprep.mubr.bf16.mxu0 0
        %1744 = vmatmul.mubr.bf16.gmra.mrb[0].mxu0 %v1596
        %v1745 = vpop.f32.mrb[0].mxu0
        %v1746 = vadd.f32 %v1569, %v1745
        %v1747 = vpop.f32.mrb[0].mxu0
        %v1748 = vpop.f32.mrb[0].mxu0
        %v1749 = vadd.f32 %v1569, %v1748
        %v1750 = vpop.f32.mrb[0].mxu0
        %1751 = vmatprep.mubr.bf16.mxu0 0
        %1752 = vmatmul.mubr.bf16.gmra.mrb[0].mxu0 %v1599
        %v1753 = vpop.f32.mrb[0].mxu0
        %v1754 = vadd.f32 %v1569, %v1753
        %v1755 = vpop.f32.mrb[0].mxu0
        %v1756 = vpop.f32.mrb[0].mxu0
        %v1757 = vadd.f32 %v1569, %v1756
        %v1758 = vpop.f32.mrb[0].mxu0
        %1759 = vmatprep.mubr.bf16.mxu0 0
        %1760 = vmatmul.mubr.bf16.gmra.mrb[0].mxu0 %v1602
        %v1761 = vpop.f32.mrb[0].mxu0
        %v1762 = vadd.f32 %v1569, %v1761
        %v1763 = vpop.f32.mrb[0].mxu0
        %v1764 = vpop.f32.mrb[0].mxu0
        %v1765 = vadd.f32 %v1569, %v1764
        %v1766 = vpop.f32.mrb[0].mxu0
        %1767 = vmatprep.mubr.bf16.mxu0 0
        %1768 = vmatmul.mubr.bf16.gmra.mrb[0].mxu0 %v1605
        %v1769 = vpop.f32.mrb[0].mxu0
        %v1770 = vadd.f32 %v1569, %v1769
        %v1771 = vpop.f32.mrb[0].mxu0
        %v1772 = vpop.f32.mrb[0].mxu0
        %v1773 = vadd.f32 %v1569, %v1772
        %v1774 = vpop.f32.mrb[0].mxu0
        %1775 = vmatprep.mubr.bf16.mxu0 0
        %1776 = vmatmul.mubr.bf16.gmra.mrb[0].mxu0 %v1608
        %v1777 = vpop.f32.mrb[0].mxu0
        %v1778 = vadd.f32 %v1569, %v1777
        %v1779 = vpop.f32.mrb[0].mxu0
        %v1780 = vpop.f32.mrb[0].mxu0
        %v1781 = vadd.f32 %v1569, %v1780
        %v1782 = vpop.f32.mrb[0].mxu0
        %1783 = vmatprep.mubr.bf16.mxu0 0
        %1784 = vmatmul.mubr.bf16.gmra.mrb[0].mxu0 %v1611
        %v1785 = vpop.f32.mrb[0].mxu0
        %v1786 = vadd.f32 %v1569, %v1785
        %v1787 = vpop.f32.mrb[0].mxu0
        %v1788 = vpop.f32.mrb[0].mxu0
        %v1789 = vadd.f32 %v1569, %v1788
        %v1790 = vpop.f32.mrb[0].mxu0
        %1791 = vmatprep.mubr.bf16.mxu0 0
        %1792 = vmatmul.mubr.bf16.gmra.mrb[0].mxu0 %v1614
        %v1793 = vpop.f32.mrb[0].mxu0
        %v1794 = vadd.f32 %v1569, %v1793
        %v1795 = vpop.f32.mrb[0].mxu0
        %v1796 = vpop.f32.mrb[0].mxu0
        %v1797 = vadd.f32 %v1569, %v1796
        %v1798 = vpop.f32.mrb[0].mxu0
        %1799 = vmatprep.mubr.bf16.mxu0 0
        %1800 = vmatmul.mubr.bf16.gmra.mrb[0].mxu0 %v1617
        %v1801 = vpop.f32.mrb[0].mxu0
        %v1802 = vadd.f32 %v1569, %v1801
        %v1803 = vpop.f32.mrb[0].mxu0
        %v1804 = vpop.f32.mrb[0].mxu0
        %v1805 = vadd.f32 %v1569, %v1804
        %v1806 = vpop.f32.mrb[0].mxu0
        %1807 = vmatprep.mubr.bf16.mxu0 0
        %1808 = vmatmul.mubr.bf16.gmra.mrb[0].mxu0 %v1620
        %v1809 = vpop.f32.mrb[0].mxu0
        %v1810 = vadd.f32 %v1569, %v1809
        %v1811 = vpop.f32.mrb[0].mxu0
        %v1812 = vpop.f32.mrb[0].mxu0
        %v1813 = vadd.f32 %v1569, %v1812
        %v1814 = vpop.f32.mrb[0].mxu0
        %1815 = vmatprep.mubr.bf16.mxu0 0
        %1816 = vmatmul.mubr.bf16.gmra.mrb[0].mxu0 %v1623
        %v1817 = vpop.f32.mrb[0].mxu0
        %v1818 = vadd.f32 %v1569, %v1817
        %v1819 = vpop.f32.mrb[0].mxu0
        %v1820 = vpop.f32.mrb[0].mxu0
        %v1821 = vadd.f32 %v1569, %v1820
        %v1822 = vpop.f32.mrb[0].mxu0
        %1823 = vmatprep.mubr.bf16.mxu0 0
        %1824 = vmatmul.mubr.bf16.gmra.mrb[0].mxu0 %v1626
        %v1825 = vpop.f32.mrb[0].mxu0
        %v1826 = vadd.f32 %v1569, %v1825
        %v1827 = vpop.f32.mrb[0].mxu0
        %v1828 = vpop.f32.mrb[0].mxu0
        %v1829 = vadd.f32 %v1569, %v1828
        %v1830 = vpop.f32.mrb[0].mxu0
        %1831 = vmatprep.mubr.bf16.mxu0 0
        %1832 = vmatmul.mubr.bf16.gmra.mrb[0].mxu0 %v1629
        %v1833 = vpop.f32.mrb[0].mxu0
        %v1834 = vadd.f32 %v1569, %v1833
        %v1835 = vpop.f32.mrb[0].mxu0
        %v1836 = vpop.f32.mrb[0].mxu0
        %v1837 = vadd.f32 %v1569, %v1836
        %v1838 = vpop.f32.mrb[0].mxu0
        %1839 = vmatprep.mubr.bf16.mxu0 0
        %1840 = vmatmul.mubr.bf16.gmra.mrb[0].mxu0 %v1632
        %v1841 = vpop.f32.mrb[0].mxu0
        %v1842 = vadd.f32 %v1569, %v1841
        %v1843 = vpop.f32.mrb[0].mxu0
        %v1844 = vpop.f32.mrb[0].mxu0
        %v1845 = vadd.f32 %v1569, %v1844
        %v1846 = vpop.f32.mrb[0].mxu0
        %1847 = vmatprep.mubr.bf16.mxu0 0
        %1848 = vmatmul.mubr.bf16.gmra.mrb[0].mxu0 %v1635
        %v1849 = vpop.f32.mrb[0].mxu0
        %v1850 = vadd.f32 %v1569, %v1849
        %v1851 = vpop.f32.mrb[0].mxu0
        %v1852 = vpop.f32.mrb[0].mxu0
        %v1853 = vadd.f32 %v1569, %v1852
        %v1854 = vpop.f32.mrb[0].mxu0
        %1855 = vmatprep.mubr.bf16.mxu0 0
        %1856 = vmatmul.mubr.bf16.gmra.mrb[0].mxu0 %v1638
        %v1857 = vpop.f32.mrb[0].mxu0
        %v1858 = vadd.f32 %v1569, %v1857
        %v1859 = vpop.f32.mrb[0].mxu0
        %v1860 = vpop.f32.mrb[0].mxu0
        %v1861 = vadd.f32 %v1569, %v1860
        %v1862 = vpop.f32.mrb[0].mxu0
        %1863 = vmatprep.mubr.bf16.mxu0 0
        %1864 = vmatmul.mubr.bf16.gmra.mrb[0].mxu0 %v1641
        %v1865 = vpop.f32.mrb[0].mxu0
        %v1866 = vadd.f32 %v1569, %v1865
        %v1867 = vpop.f32.mrb[0].mxu0
        %v1868 = vpop.f32.mrb[0].mxu0
        %v1869 = vadd.f32 %v1569, %v1868
        %v1870 = vpop.f32.mrb[0].mxu0
        %1871 = vmatprep.mubr.bf16.mxu0 0
        %1872 = vmatmul.mubr.bf16.gmra.mrb[0].mxu0 %v1644
        %v1873 = vpop.f32.mrb[0].mxu0
        %v1874 = vadd.f32 %v1569, %v1873
        %v1875 = vpop.f32.mrb[0].mxu0
        %v1876 = vpop.f32.mrb[0].mxu0
        %v1877 = vadd.f32 %v1569, %v1876
        %v1878 = vpop.f32.mrb[0].mxu0
        %1879 = vmatprep.mubr.bf16.mxu0 0
        %1880 = vmatmul.mubr.bf16.gmra.mrb[0].mxu0 %v1647
        %v1881 = vpop.f32.mrb[0].mxu0
        %v1882 = vadd.f32 %v1569, %v1881
        %v1883 = vpop.f32.mrb[0].mxu0
        %v1884 = vpop.f32.mrb[0].mxu0
        %v1885 = vadd.f32 %v1569, %v1884
        %v1886 = vpop.f32.mrb[0].mxu0
        %1887 = vmatprep.mubr.bf16.mxu0 0
        %1888 = vmatmul.mubr.bf16.gmra.mrb[0].mxu0 %v1650
        %v1889 = vpop.f32.mrb[0].mxu0
        %v1890 = vadd.f32 %v1569, %v1889
        %v1891 = vpop.f32.mrb[0].mxu0
        %v1892 = vpop.f32.mrb[0].mxu0
        %v1893 = vadd.f32 %v1569, %v1892
        %v1894 = vpop.f32.mrb[0].mxu0
        %1895 = vmatprep.mubr.bf16.mxu0 0
        %1896 = vmatmul.mubr.bf16.gmra.mrb[0].mxu0 %v1653
        %v1897 = vpop.f32.mrb[0].mxu0
        %v1898 = vadd.f32 %v1569, %v1897
        %v1899 = vpop.f32.mrb[0].mxu0
        %v1900 = vpop.f32.mrb[0].mxu0
        %v1901 = vadd.f32 %v1569, %v1900
        %v1902 = vpop.f32.mrb[0].mxu0
        %1903 = vmatprep.mubr.bf16.mxu0 0
        %1904 = vmatmul.mubr.bf16.gmra.mrb[0].mxu0 %v1656
        %v1905 = vpop.f32.mrb[0].mxu0
        %v1906 = vadd.f32 %v1569, %v1905
        %v1907 = vpop.f32.mrb[0].mxu0
        %v1908 = vpop.f32.mrb[0].mxu0
        %v1909 = vadd.f32 %v1569, %v1908
        %v1910 = vpop.f32.mrb[0].mxu0
        %1911 = vmatprep.mubr.bf16.mxu0 0
        %1912 = vmatmul.mubr.bf16.gmra.mrb[0].mxu0 %v1659
        %v1913 = vpop.f32.mrb[0].mxu0
        %v1914 = vadd.f32 %v1569, %v1913
        %v1915 = vpop.f32.mrb[0].mxu0
        %v1916 = vpop.f32.mrb[0].mxu0
        %v1917 = vadd.f32 %v1569, %v1916
        %v1918 = vpop.f32.mrb[0].mxu0
        %1919 = vmatprep.mubr.bf16.mxu0 0
        %1920 = vmatmul.mubr.bf16.gmra.mrb[0].mxu0 %v1662
        %v1921 = vpop.f32.mrb[0].mxu0
        %v1922 = vadd.f32 %v1569, %v1921
        %v1923 = vpop.f32.mrb[0].mxu0
        %v1924 = vpop.f32.mrb[0].mxu0
        %v1925 = vadd.f32 %v1569, %v1924
        %v1926 = vpop.f32.mrb[0].mxu0
        %1927 = vmatprep.mubr.bf16.mxu0 0
        %1928 = vmatmul.mubr.bf16.gmra.mrb[0].mxu0 %v1665
        %v1929 = vpop.f32.mrb[0].mxu0
        %v1930 = vadd.f32 %v1569, %v1929
        %v1931 = vpop.f32.mrb[0].mxu0
        %v1932 = vpop.f32.mrb[0].mxu0
        %v1933 = vadd.f32 %v1569, %v1932
        %v1934 = vpop.f32.mrb[0].mxu0
        %1935 = vmatprep.mubr.bf16.mxu0 0
        %1936 = vmatmul.mubr.bf16.gmra.mrb[0].mxu0 %v1668
        %v1937 = vpop.f32.mrb[0].mxu0
        %v1938 = vadd.f32 %v1569, %v1937
        %v1939 = vpop.f32.mrb[0].mxu0
        %v1940 = vpop.f32.mrb[0].mxu0
        %v1941 = vadd.f32 %v1569, %v1940
        %v1942 = vpop.f32.mrb[0].mxu0
        %1943 = vmatprep.mubr.bf16.mxu0 0
        %1944 = vmatmul.mubr.bf16.gmra.mrb[0].mxu0 %v1671
        %v1945 = vpop.f32.mrb[0].mxu0
        %v1946 = vadd.f32 %v1569, %v1945
        %v1947 = vpop.f32.mrb[0].mxu0
        %v1948 = vpop.f32.mrb[0].mxu0
        %v1949 = vadd.f32 %v1569, %v1948
        %v1950 = vpop.f32.mrb[0].mxu0
        %1951 = vmatprep.mubr.bf16.mxu0 0
        %1952 = vmatmul.mubr.bf16.gmra.mrb[0].mxu0 %v1674
        %v1953 = vpop.f32.mrb[0].mxu0
        %v1954 = vadd.f32 %v1569, %v1953
        %v1955 = vpop.f32.mrb[0].mxu0
        %v1956 = vpop.f32.mrb[0].mxu0
        %v1957 = vadd.f32 %v1569, %v1956
        %v1958 = vpop.f32.mrb[0].mxu0
        %1959 = vmatprep.mubr.bf16.mxu0 0
        %1960 = vmatmul.mubr.bf16.gmra.mrb[0].mxu0 %v1677
        %v1961 = vpop.f32.mrb[0].mxu0
        %v1962 = vadd.f32 %v1569, %v1961
        %v1963 = vpop.f32.mrb[0].mxu0
        %v1964 = vpop.f32.mrb[0].mxu0
        %v1965 = vadd.f32 %v1569, %v1964
        %v1966 = vpop.f32.mrb[0].mxu0
        %1967 = vdwg.mxu0
        %v1968 = vmax.f32 %v1714, 0.0
        %v1969 = vmax.f32 %v1717, 0.0
        %v1970 = vmax.f32 %v1722, 0.0
        %v1971 = vmax.f32 %v1725, 0.0
        %v1972 = vmax.f32 %v1730, 0.0
        %v1973 = vmax.f32 %v1733, 0.0
        %v1974 = vmax.f32 %v1738, 0.0
        %v1975 = vmax.f32 %v1741, 0.0
        %v1976 = vmax.f32 %v1746, 0.0
        %v1977 = vmax.f32 %v1749, 0.0
        %v1978 = vmax.f32 %v1754, 0.0
        %v1979 = vmax.f32 %v1757, 0.0
        %v1980 = vmax.f32 %v1762, 0.0
        %v1981 = vmax.f32 %v1765, 0.0
        %v1982 = vmax.f32 %v1770, 0.0
        %v1983 = vmax.f32 %v1773, 0.0
        %v1984 = vmax.f32 %v1778, 0.0
        %v1985 = vmax.f32 %v1781, 0.0
        %v1986 = vmax.f32 %v1786, 0.0
        %v1987 = vmax.f32 %v1789, 0.0
        %v1988 = vmax.f32 %v1794, 0.0
        %v1989 = vmax.f32 %v1797, 0.0
        %v1990 = vmax.f32 %v1802, 0.0
        %v1991 = vmax.f32 %v1805, 0.0
        %v1992 = vmax.f32 %v1810, 0.0
        %v1993 = vmax.f32 %v1813, 0.0
        %v1994 = vmax.f32 %v1818, 0.0
        %v1995 = vmax.f32 %v1821, 0.0
        %v1996 = vmax.f32 %v1826, 0.0
        %v1997 = vmax.f32 %v1829, 0.0
        %v1998 = vmax.f32 %v1834, 0.0
        %v1999 = vmax.f32 %v1837, 0.0
        %v2000 = vmax.f32 %v1842, 0.0
        %v2001 = vmax.f32 %v1845, 0.0
        %v2002 = vmax.f32 %v1850, 0.0
        %v2003 = vmax.f32 %v1853, 0.0
        %v2004 = vmax.f32 %v1858, 0.0
        %v2005 = vmax.f32 %v1861, 0.0
        %v2006 = vmax.f32 %v1866, 0.0
        %v2007 = vmax.f32 %v1869, 0.0
        %v2008 = vmax.f32 %v1874, 0.0
        %v2009 = vmax.f32 %v1877, 0.0
        %v2010 = vmax.f32 %v1882, 0.0
        %v2011 = vmax.f32 %v1885, 0.0
        %v2012 = vmax.f32 %v1890, 0.0
        %v2013 = vmax.f32 %v1893, 0.0
        %v2014 = vmax.f32 %v1898, 0.0
        %v2015 = vmax.f32 %v1901, 0.0
        %v2016 = vmax.f32 %v1906, 0.0
        %v2017 = vmax.f32 %v1909, 0.0
        %v2018 = vmax.f32 %v1914, 0.0
        %v2019 = vmax.f32 %v1917, 0.0
        %v2020 = vmax.f32 %v1922, 0.0
        %v2021 = vmax.f32 %v1925, 0.0
        %v2022 = vmax.f32 %v1930, 0.0
        %v2023 = vmax.f32 %v1933, 0.0
        %v2024 = vmax.f32 %v1938, 0.0
        %v2025 = vmax.f32 %v1941, 0.0
        %v2026 = vmax.f32 %v1946, 0.0
        %v2027 = vmax.f32 %v1949, 0.0
        %v2028 = vmax.f32 %v1954, 0.0
        %v2029 = vmax.f32 %v1957, 0.0
        %v2030 = vmax.f32 %v1962, 0.0
        %v2031 = vmax.f32 %v1965, 0.0
        %v2032 = vpack.c.bf16 %v1969, %v1968
        %v2033 = vpack.c.bf16 %v1971, %v1970
        %v2034 = vpack.c.bf16 %v1973, %v1972
        %v2035 = vpack.c.bf16 %v1975, %v1974
        %v2036 = vpack.c.bf16 %v1977, %v1976
        %v2037 = vpack.c.bf16 %v1979, %v1978
        %v2038 = vpack.c.bf16 %v1981, %v1980
        %v2039 = vpack.c.bf16 %v1983, %v1982
        %v2040 = vpack.c.bf16 %v1985, %v1984
        %v2041 = vpack.c.bf16 %v1987, %v1986
        %v2042 = vpack.c.bf16 %v1989, %v1988
        %v2043 = vpack.c.bf16 %v1991, %v1990
        %v2044 = vpack.c.bf16 %v1993, %v1992
        %v2045 = vpack.c.bf16 %v1995, %v1994
        %v2046 = vpack.c.bf16 %v1997, %v1996
        %v2047 = vpack.c.bf16 %v1999, %v1998
        %v2048 = vpack.c.bf16 %v2001, %v2000
        %v2049 = vpack.c.bf16 %v2003, %v2002
        %v2050 = vpack.c.bf16 %v2005, %v2004
        %v2051 = vpack.c.bf16 %v2007, %v2006
        %v2052 = vpack.c.bf16 %v2009, %v2008
        %v2053 = vpack.c.bf16 %v2011, %v2010
        %v2054 = vpack.c.bf16 %v2013, %v2012
        %v2055 = vpack.c.bf16 %v2015, %v2014
        %v2056 = vpack.c.bf16 %v2017, %v2016
        %v2057 = vpack.c.bf16 %v2019, %v2018
        %v2058 = vpack.c.bf16 %v2021, %v2020
        %v2059 = vpack.c.bf16 %v2023, %v2022
        %v2060 = vpack.c.bf16 %v2025, %v2024
        %v2061 = vpack.c.bf16 %v2027, %v2026
        %v2062 = vpack.c.bf16 %v2029, %v2028
        %v2063 = vpack.c.bf16 %v2031, %v2030
        %v2064 = vld [vmem:[%s7] sm:$0x1]
        %v2065 = vld [vmem:[#allocation2] sm:$0x1]
        %2067 = vset.pattern.permute.xlu0 0
        %2068 = vperm.xlu0 %2067, %v2065
        %v2069 = vpop.permute.xlu0 %2068
        %v2071 = vlaneseq
        %v2072 = vshrl.u32 %v2071, 7
        %v2073 = vsub.s32 0, %v2072
        %v2074 = vrot.slane %v2069, %v2073
        %v2076 = vsel %vm1078, %v2064, 0
        %v2079 = vsel %vm1078, %v2032, 0
        %v2082 = vsel %vm1078, %v2033, 0
        %v2085 = vsel %vm1078, %v2034, 0
        %v2088 = vsel %vm1078, %v2035, 0
        %v2091 = vsel %vm1078, %v2036, 0
        %v2094 = vsel %vm1078, %v2037, 0
        %v2097 = vsel %vm1078, %v2038, 0
        %v2100 = vsel %vm1078, %v2039, 0
        %v2103 = vsel %vm1078, %v2040, 0
        %v2106 = vsel %vm1078, %v2041, 0
        %v2109 = vsel %vm1078, %v2042, 0
        %v2112 = vsel %vm1078, %v2043, 0
        %v2115 = vsel %vm1078, %v2044, 0
        %v2118 = vsel %vm1078, %v2045, 0
        %v2121 = vsel %vm1078, %v2046, 0
        %v2124 = vsel %vm1078, %v2047, 0
        %v2127 = vsel %vm1078, %v2048, 0
        %v2130 = vsel %vm1078, %v2049, 0
        %v2133 = vsel %vm1078, %v2050, 0
        %v2136 = vsel %vm1078, %v2051, 0
        %v2139 = vsel %vm1078, %v2052, 0
        %v2142 = vsel %vm1078, %v2053, 0
        %v2145 = vsel %vm1078, %v2054, 0
        %v2148 = vsel %vm1078, %v2055, 0
        %v2151 = vsel %vm1078, %v2056, 0
        %v2154 = vsel %vm1078, %v2057, 0
        %v2157 = vsel %vm1078, %v2058, 0
        %v2160 = vsel %vm1078, %v2059, 0
        %v2163 = vsel %vm1078, %v2060, 0
        %v2166 = vsel %vm1078, %v2061, 0
        %v2169 = vsel %vm1078, %v2062, 0
        %v2172 = vsel %vm1078, %v2063, 0
        %2174 = vmatprep.subr.bf16.mxu0 0
        %2175 = vmatpush1.bf16.xpose.msra.mxu0 %v2079
        %2176 = vmatprep.subr.bf16.mxu0 0
        %2177 = vmatpush1.bf16.xpose.msra.mxu0 %v2082
        %2178 = vmatprep.subr.bf16.mxu0 0
        %2179 = vmatpush1.bf16.xpose.msra.mxu0 %v2085
        %2180 = vmatprep.subr.bf16.mxu0 0
        %2181 = vmatpush1.bf16.xpose.msra.mxu0 %v2088
        %2182 = vmatprep.subr.bf16.mxu0 0
        %2183 = vmatpush1.bf16.xpose.msra.mxu0 %v2091
        %2184 = vmatprep.subr.bf16.mxu0 0
        %2185 = vmatpush1.bf16.xpose.msra.mxu0 %v2094
        %2186 = vmatprep.subr.bf16.mxu0 0
        %2187 = vmatpush1.bf16.xpose.msra.mxu0 %v2097
        %2188 = vmatprep.subr.bf16.mxu0 0
        %2189 = vmatpush1.bf16.xpose.msra.mxu0 %v2100
        %2190 = vmatprep.subr.bf16.mxu0 0
        %2191 = vmatpush1.bf16.xpose.msra.mxu0 %v2103
        %2192 = vmatprep.subr.bf16.mxu0 0
        %2193 = vmatpush1.bf16.xpose.msra.mxu0 %v2106
        %2194 = vmatprep.subr.bf16.mxu0 0
        %2195 = vmatpush1.bf16.xpose.msra.mxu0 %v2109
        %2196 = vmatprep.subr.bf16.mxu0 0
        %2197 = vmatpush1.bf16.xpose.msra.mxu0 %v2112
        %2198 = vmatprep.subr.bf16.mxu0 0
        %2199 = vmatpush1.bf16.xpose.msra.mxu0 %v2115
        %2200 = vmatprep.subr.bf16.mxu0 0
        %2201 = vmatpush1.bf16.xpose.msra.mxu0 %v2118
        %2202 = vmatprep.subr.bf16.mxu0 0
        %2203 = vmatpush1.bf16.xpose.msra.mxu0 %v2121
        %2204 = vmatprep.subr.bf16.mxu0 0
        %2205 = vmatpush1.bf16.xpose.msra.mxu0 %v2124
        %2206 = vmatprep.mubr.bf16.mxu0 0
        %2207 = vmatmul.mubr.bf16.gmra.mrb[0].mxu0 %v2076
        %v2208 = vpop.f32.mrb[0].mxu0
        %v2209 = vadd.f32 %v2074, %v2208
        %v2210 = vpop.f32.mrb[0].mxu0
        %v2211 = vadd.f32 %v2074, %v2210
        %v2212 = vpop.f32.mrb[0].mxu0
        %v2213 = vpop.f32.mrb[0].mxu0
        %2214 = vdwg.mxu0
        %2215 = vmatprep.subr.bf16.mxu0 0
        %2216 = vmatpush1.bf16.xpose.msra.mxu0 %v2127
        %2217 = vmatprep.subr.bf16.mxu0 0
        %2218 = vmatpush1.bf16.xpose.msra.mxu0 %v2130
        %2219 = vmatprep.subr.bf16.mxu0 0
        %2220 = vmatpush1.bf16.xpose.msra.mxu0 %v2133
        %2221 = vmatprep.subr.bf16.mxu0 0
        %2222 = vmatpush1.bf16.xpose.msra.mxu0 %v2136
        %2223 = vmatprep.subr.bf16.mxu0 0
        %2224 = vmatpush1.bf16.xpose.msra.mxu0 %v2139
        %2225 = vmatprep.subr.bf16.mxu0 0
        %2226 = vmatpush1.bf16.xpose.msra.mxu0 %v2142
        %2227 = vmatprep.subr.bf16.mxu0 0
        %2228 = vmatpush1.bf16.xpose.msra.mxu0 %v2145
        %2229 = vmatprep.subr.bf16.mxu0 0
        %2230 = vmatpush1.bf16.xpose.msra.mxu0 %v2148
        %2231 = vmatprep.subr.bf16.mxu0 0
        %2232 = vmatpush1.bf16.xpose.msra.mxu0 %v2151
        %2233 = vmatprep.subr.bf16.mxu0 0
        %2234 = vmatpush1.bf16.xpose.msra.mxu0 %v2154
        %2235 = vmatprep.subr.bf16.mxu0 0
        %2236 = vmatpush1.bf16.xpose.msra.mxu0 %v2157
        %2237 = vmatprep.subr.bf16.mxu0 0
        %2238 = vmatpush1.bf16.xpose.msra.mxu0 %v2160
        %2239 = vmatprep.subr.bf16.mxu0 0
        %2240 = vmatpush1.bf16.xpose.msra.mxu0 %v2163
        %2241 = vmatprep.subr.bf16.mxu0 0
        %2242 = vmatpush1.bf16.xpose.msra.mxu0 %v2166
        %2243 = vmatprep.subr.bf16.mxu0 0
        %2244 = vmatpush1.bf16.xpose.msra.mxu0 %v2169
        %2245 = vmatprep.subr.bf16.mxu0 0
        %2246 = vmatpush1.bf16.xpose.msra.mxu0 %v2172
        %2247 = vmatprep.mubr.bf16.mxu0 0
        %2248 = vmatmul.mubr.bf16.gmra.mrb[0].mxu0 %v2076
        %v2249 = vpop.f32.mrb[0].mxu0
        %v2250 = vadd.f32 %v2074, %v2249
        %v2251 = vpop.f32.mrb[0].mxu0
        %v2252 = vadd.f32 %v2074, %v2251
        %v2253 = vpop.f32.mrb[0].mxu0
        %v2254 = vpop.f32.mrb[0].mxu0
        %2255 = vdwg.mxu0
        %v2256 = vxor.u32 %v2209, 2147483648
        %v2257 = vxor.u32 %v2211, 2147483648
        %v2258 = vxor.u32 %v2250, 2147483648
        %v2259 = vxor.u32 %v2252, 2147483648
        %v2260 = vmul.f32 %v2256, 1.442695
        %v2261 = vpow.pop %v2260
        %v2262 = vmul.f32 %v2257, 1.442695
        %v2263 = vpow.pop %v2262
        %v2264 = vmul.f32 %v2258, 1.442695
        %v2265 = vpow.pop %v2264
        %v2266 = vmul.f32 %v2259, 1.442695
        %v2267 = vpow.pop %v2266
        %v2268 = vadd.f32 %v2261, 1.0
        %v2269 = vadd.f32 %v2263, 1.0
        %v2270 = vadd.f32 %v2265, 1.0
        %v2271 = vadd.f32 %v2267, 1.0
        %v2272 = vrcp.pop %v2268
        %v2273 = vmul.f32 1.0, %v2272
        %v2274 = vrcp.pop %v2269
        %v2275 = vmul.f32 1.0, %v2274
        %v2276 = vrcp.pop %v2270
        %v2277 = vmul.f32 1.0, %v2276
        %v2278 = vrcp.pop %v2271
        %v2279 = vmul.f32 1.0, %v2278
        %v2284 = vcombine.low %v2273, %v2275
        %v2285 = vcombine.low %v2277, %v2279
        %v2287 = vunpack.c.l.s4 1966171168
        %v2288 = vunpack.c.0.s8 %v2287
        %v2289 = vlaneseq
        %v2290 = vshrl.u32 %v2289, 7
        %v2291 = vsub.s32 %v2288, %v2290
        %v2292 = vrot.slane %v2284, %v2291
        %v2294 = vunpack.c.l.s4 1966171168
        %v2295 = vunpack.c.0.s8 %v2294
        %v2296 = vlaneseq
        %v2297 = vshrl.u32 %v2296, 7
        %v2298 = vsub.s32 %v2295, %v2297
        %v2299 = vrot.slane %v2285, %v2298
        %v2300 = vcombine.low %v2292, %v2299
        %v2302 = vunpack.c.l.s4 1966171168
        %v2303 = vunpack.c.0.s8 %v2302
        %v2304 = vlaneseq
        %v2305 = vshrl.u32 %v2304, 7
        %v2306 = vsub.s32 %v2303, %v2305
        %v2307 = vrot.slane %v2300, %v2306
        %v2309 = vlaneseq
        %vm2310 = vcmp.ge.s32.totalorder %v2309, 0
        %vm2311 = vcmp.lt.s32.totalorder %v2309, 512
        %vm2312 = vmand %vm2310, %vm2311
        %2313 = vst.msk [vmem:[%s328] sm:$0xf] %vm2312, %v2307
        %s2314 = sand.u32 %s227, 1
        %s2315 = scalar_lea.sflag [#allocation4], %s2314
        %s2316 = sand.u32 %s227, 1
        %s2317 = smul.addr %s2316, 4
        %s2318 = scalar_lea.vmem [#allocation3], %s2317
        // Predicated region
        $region57: #{tpu_custom_call.1} parent=55 // pred_check
          %p2319 = pneg %p237
        $region58: #{tpu_custom_call.1} parent=55 // pred_check_branch
          %2321 = sbr.rel (%p2319) target = $region60
        $region59: #{tpu_custom_call.1} parent=55 // pred_region
          %s2322 = smul.u32 4, %s25
          %s2324 = ssub.s32 64, 64
          %2325 = vsyncadd %s2315, %s2324
          %s2326 = smul.addr %s2322, 16
          %s2327 = scalar_lea.hbm %s9, %s2326
          %s2329 = sshll.u32 %s2318, 4
          %s2330 = int_to_ptr.vmem [resolvable:$true] %s2329
          %2332 = dma.vmem_to_hbm [thread:$0]  %s2330, 64, %s2327, %s2315
        $region60: #{tpu_custom_call.1} parent=55 // pred_fallthru
          _
      $region56: #{tpu_custom_call.1} parent=5 // pred_fallthru
        _
      %p2333 = scmp.le.s32.totalorder 2, %s20
      // Predicated region
      $region61: #{tpu_custom_call.1} parent=5 // pred_check
        %p2334 = pneg %p2333
      $region62: #{tpu_custom_call.1} parent=5 // pred_check_branch
        %2336 = sbr.rel (%p2334) target = $region64
      $region63: #{tpu_custom_call.1} parent=5 // pred_region
        %s2337 = ssub.s32 %s20, 2
        // Predicated region
        $region65: #{tpu_custom_call.1} parent=63 // pred_check
          %p2338 = pneg %p243
        $region66: #{tpu_custom_call.1} parent=63 // pred_check_branch
          %2340 = sbr.rel (%p2338) target = $region68
        $region67: #{tpu_custom_call.1} parent=63 // pred_region
          %s2341 = sand.u32 %s228, 1
          %s2342 = scalar_lea.sflag [#allocation4], %s2341
          %s2343 = sand.u32 %s228, 1
          %s2344 = smul.addr %s2343, 4
          %s2345 = scalar_lea.vmem [#allocation3], %s2344
          %2346 = dma.done %s2342, 64
        $region68: #{tpu_custom_call.1} parent=63 // pred_fallthru
          _
      $region64: #{tpu_custom_call.1} parent=5 // pred_fallthru
        _
    $region6: #{tpu_custom_call.1} parent=1 // loop_footer
      %s24 = sadd.s32 1, %s20
    $region7: #{tpu_custom_call.1} parent=1 // loop_footer_branch
      %19 = sbr.rel target = $region3
    $region8: #{tpu_custom_call.1} parent=1 // loop_exit
      _
    %2347 = vsyncpa [#allocation4], 1
    %s2348 = scalar_lea.sflag [#allocation4], 1
    %2349 = vsyncpa %s2348, 1

</llo_original>
